<compile_context>
chip_gen: v7x
topology: tpu7x:2x2x1
jax: 0.10.0
libtpu: 0.0.40
codegen_flags: <defaults>
</compile_context>

<pallas_src>
import functools

import jax
import jax.numpy as jnp
from jax.experimental import pallas as pl
from jax.experimental.pallas import tpu as pltpu

LANES = 128  # lane width of every slab row / conv activation


def _round_up(x, m):
    return (x + m - 1) // m * m


# ------------------------------ static plan ---------------------------------

def _make_plan(T, Cin, N, params):
    """Shape-only layout plan: slab row offsets + derived static sizes."""
    n_conv, n_fc = len(params["conv"]), len(params["fc"])
    assert n_conv >= 1 and n_fc >= 1, "fused kernel expects >=1 conv and >=1 fc layer"
    # TODO(synk): degenerate n_conv==0 / n_fc==0 configs are not fused here.

    row = 0
    conv = []
    prev_rows = _round_up(Cin, 8)          # sublane rows of current activation
    prev_cout = Cin
    for (w, _b) in params["conv"]:
        cout, cin, K = w.shape
        assert cin == prev_cout, "conv channel chain mismatch"
        out_rows = _round_up(cout, 8)
        w_offs = []
        for _k in range(K):                # one (out_rows, in_rows) block per tap
            w_offs.append(row)
            row += out_rows
        b_off = row                        # bias pre-broadcast to (out_rows, 128)
        row += out_rows
        conv.append(dict(cin=cin, cout=cout, K=K, in_rows=prev_rows,
                         out_rows=out_rows, w_offs=tuple(w_offs), b_off=b_off))
        prev_rows, prev_cout = out_rows, cout

    delta = sum(c["K"] - 1 for c in conv)
    L = N - delta                          # valid conv output length per sample
    C = conv[-1]["cout"]
    assert L >= 1
    din1, m0 = params["fc"][0][0].shape
    assert din1 == C * L, (din1, C, L)

    window = _round_up(L, 8)               # per-sample lane window fed to FC1
    assert T * N <= LANES and (T - 1) * N + window <= LANES, (
        "batch*length must fit in 128 lanes")
    # TODO(synk): for T*N > 128 lanes, tile samples over a 'parallel' grid axis
    # (split across v7x's 2 TensorCores) and re-derive tiles for 64 MiB VMEM.

    fc1_w_offs = []
    for _c in range(C):                    # per-channel (window, m0) blocks
        fc1_w_offs.append(row)
        row += window
    row = _round_up(row, 8)
    fc1_b_off = row
    row += 8
    fc_rest = []
    for (w, _b) in params["fc"][1:]:
        din, dout = w.shape
        w_off = row
        row += _round_up(din, 8)
        b_off = row
        row += 8
        fc_rest.append(dict(din=din, dout=dout, w_off=w_off, b_off=b_off))

    return dict(T=T, N=N, L=L, C=C, window=window, m0=m0,
                x_rows=_round_up(Cin, 8), cin=Cin, conv=conv,
                fc1_w_offs=tuple(fc1_w_offs), fc1_b_off=fc1_b_off,
                fc_rest=fc_rest, total_rows=max(_round_up(row, 8), 8),
                dout=params["fc"][-1][0].shape[1])


# ------------------------------ host packing --------------------------------

def _pack_x(x, plan):
    """(T, Cin, N) -> (Cin_pad, 128) with sample t at lanes [t*N, t*N+N)."""
    T, Cin, N = x.shape
    x_lanes = jnp.transpose(x, (1, 0, 2)).reshape(Cin, T * N).astype(jnp.float32)
    slab = jnp.zeros((plan["x_rows"], LANES), jnp.float32)
    return slab.at[:Cin, :T * N].set(x_lanes)


def _pack_weights(params, plan):
    """All conv/FC weights + biases in a single pre-padded f32 slab."""
    slab = jnp.zeros((plan["total_rows"], LANES), jnp.float32)
    for spec, (w, b) in zip(plan["conv"], params["conv"]):
        cout, cin = spec["cout"], spec["cin"]
        for k, off in enumerate(spec["w_offs"]):
            slab = slab.at[off:off + cout, :cin].set(w[:, :, k].astype(jnp.float32))
        bb = jnp.broadcast_to(b.astype(jnp.float32)[:, None], (cout, LANES))
        slab = slab.at[spec["b_off"]:spec["b_off"] + cout, :].set(bb)
    # FC1: reshape (C*L, M0) -> (C, L, M0); row index c*L+l is exactly the
    # torch flatten order.  Rows l in [L, window) stay zero so the garbage
    # lanes beyond the valid conv length are multiplied by 0 in the kernel.
    C, L, m0 = plan["C"], plan["L"], plan["m0"]
    w1, b1 = params["fc"][0]
    w1r = w1.astype(jnp.float32).reshape(C, L, m0)
    for c, off in enumerate(plan["fc1_w_offs"]):
        slab = slab.at[off:off + L, :m0].set(w1r[c])
    slab = slab.at[plan["fc1_b_off"], :m0].set(b1.astype(jnp.float32))
    for spec, (w, b) in zip(plan["fc_rest"], params["fc"][1:]):
        din, dout = spec["din"], spec["dout"]
        slab = slab.at[spec["w_off"]:spec["w_off"] + din, :dout].set(
            w.astype(jnp.float32))
        slab = slab.at[spec["b_off"], :dout].set(b.astype(jnp.float32))
    return slab


# ------------------------------ fused kernel --------------------------------

def _fused_forward_kernel(x_ref, w_ref, o_ref, *, plan):
    T, N = plan["T"], plan["N"]
    window, m0 = plan["window"], plan["m0"]

    # ---- conv + ReLU stack: both samples batched along lanes ---------------
    y = x_ref[...]                                          # (in_rows, 128) f32
    for spec in plan["conv"]:
        in_rows, out_rows = spec["in_rows"], spec["out_rows"]
        acc = None
        for k, off in enumerate(spec["w_offs"]):
            wk = w_ref[off:off + out_rows, 0:in_rows]       # load at use site
            # valid-conv tap shift: out[:, j] += Wk @ y[:, j+k]; the shift is a
            # lane rotation (XLU slot), wrap-around only reaches garbage lanes.
            yk = y if k == 0 else pltpu.roll(y, shift=(-k) % LANES, axis=1)
            part = jnp.dot(wk, yk, preferred_element_type=jnp.float32)
            acc = part if acc is None else acc + part
        bias = w_ref[spec["b_off"]:spec["b_off"] + out_rows, :]  # pre-broadcast
        y = jnp.maximum(acc + bias, 0.0)

    # ---- torch flatten (index c*L+l) folded into FC1 ------------------------
    # h[t] = sum_c y[c, t*N : t*N+window] @ W1_block_c   (zero rows kill l>=L)
    rows = []
    for t in range(T):
        base = t * N
        acc = None
        for off in plan["fc1_w_offs"]:
            w1c = w_ref[off:off + window, 0:m0]
            part = jnp.dot(y[off - off:1, base:base + window]
                           if False else y[plan["fc1_w_offs"].index(off):plan["fc1_w_offs"].index(off) + 1,
                                           base:base + window],
                           w1c, preferred_element_type=jnp.float32)
            acc = part if acc is None else acc + part
        rows.append(acc)
    h = jnp.concatenate(rows, axis=0)                       # (T, m0)
    h = h + w_ref[plan["fc1_b_off"]:plan["fc1_b_off"] + 1, 0:m0]

    # ---- remaining FC layers (ReLU only BETWEEN FC layers) ------------------
    for spec in plan["fc_rest"]:
        h = jnp.maximum(h, 0.0)
        wj = w_ref[spec["w_off"]:spec["w_off"] + spec["din"], 0:spec["dout"]]
        h = jnp.dot(h, wj, preferred_element_type=jnp.float32)
        h = h + w_ref[spec["b_off"]:spec["b_off"] + 1, 0:spec["dout"]]

    o_ref[...] = h


# ------------------------------ host wrapper --------------------------------

def convnn_forward(x, params):
    """Mirrors ConvNN.forward; the whole net is ONE fused pallas_call."""
    x = x.astype(jnp.float32)
    if x.ndim == 2:                         # torch IndexError branch: unsqueeze(1)
        x = x[:, None, :]
    T, Cin, N = x.shape
    assert Cin == params["conv"][0][0].shape[1], "F[0] mismatch"

    plan = _make_plan(T, Cin, N, params)
    x_slab = _pack_x(x, plan)
    w_slab = _pack_weights(params, plan)

    flops = 0
    for spec in plan["conv"]:
        flops += 2 * spec["K"] * spec["out_rows"] * spec["in_rows"] * LANES
    flops += 2 * T * plan["C"] * plan["window"] * plan["m0"]
    for spec in plan["fc_rest"]:
        flops += 2 * T * spec["din"] * spec["dout"]
    bytes_accessed = 4 * (x_slab.size + w_slab.size + T * plan["dout"])

    vmem = pl.BlockSpec(memory_space=pltpu.MemorySpace.VMEM)
    out = pl.pallas_call(
        functools.partial(_fused_forward_kernel, plan=plan),
        out_shape=jax.ShapeDtypeStruct((T, plan["dout"]), jnp.float32),
        in_specs=[vmem, vmem],              # 2 operands -> 2 small DMAs total
        out_specs=vmem,
        cost_estimate=pl.CostEstimate(flops=flops, transcendentals=0,
                                      bytes_accessed=bytes_accessed),
    )(x_slab, w_slab)
    return out.reshape(T, 1, plan["dout"])  # == torch (T, 1, M[-1]) output


# --------------------------- parameters & reference -------------------------

def init_params(key, F, kernel_size, N, M):
    """Deterministic init mirroring the module's parameter shapes."""
    params = {"conv": [], "fc": []}
    for l in range(len(F) - 1):
        key, kw, kb = jax.random.split(key, 3)
        bound = 1.0 / float(jnp.sqrt(F[l] * kernel_size))
        w = jax.random.uniform(kw, (F[l + 1], F[l], kernel_size), jnp.float32,
                               -bound, bound)
        b = jax.random.uniform(kb, (F[l + 1],), jnp.float32, -bound, bound)
        params["conv"].append((w, b))
    delta_len = (kernel_size - 1) * (len(F) - 1)
    dims = [(N - delta_len) * F[-1]] + list(M)
    for m in range(len(M)):
        key, kw, kb = jax.random.split(key, 3)
        bound = 1.0 / float(jnp.sqrt(dims[m]))
        # stored as (Din, Dout) == torch weight (Dout, Din) pre-transposed
        w = jax.random.uniform(kw, (dims[m], dims[m + 1]), jnp.float32,
                               -bound, bound)
        b = jax.random.uniform(kb, (dims[m + 1],), jnp.float32, -bound, bound)
        params["fc"].append((w, b))
    return params


def ref_forward(x, params):
    """Pure-JAX reference with identical semantics to the torch module."""
    y = x.astype(jnp.float32)
    if y.ndim == 2:
        y = y[:, None, :]
    for (w, b) in params["conv"]:
        K = w.shape[2]
        Lout = y.shape[2] - K + 1
        acc = sum(
            jnp.einsum("tcl,oc->tol", y[:, :, k:k + Lout], w[:, :, k])
            for k in range(K)
        )
        y = jnp.maximum(acc + b[None, :, None], 0.0)
    T, C, L = y.shape
    y = y.reshape(T, C * L)
    n_fc = len(params["fc"])
    for i, (w, b) in enumerate(params["fc"]):
        y = y @ w + b
        if i < n_fc - 1:
            y = jnp.maximum(y, 0.0)
    return y.reshape(T, 1, -1)


# ---------------------------------- main ------------------------------------

if __name__ == "__main__":
    # Small config consistent with the module:
    #   N=16 (signal length), F=[4, 8, 8] (conv features), kernel_size=3,
    #   M=[32, 10] (FC widths), batch T=2.
    N, F, kernel_size, M, T = 16, [4, 8, 8], 3, [32, 10], 2

    key = jax.random.PRNGKey(0)
    key, kx = jax.random.split(key)
    x = jax.random.normal(kx, (T, F[0], N), jnp.float32)
    params = init_params(key, F, kernel_size, N, M)

    fwd = jax.jit(convnn_forward)
    out = jax.block_until_ready(fwd(x, params))

    delta_len = (kernel_size - 1) * (len(F) - 1)
    assert out.shape == (T, 1, M[-1]), out.shape
    assert (N - delta_len) * F[-1] == params["fc"][0][0].shape[0]

    ref = ref_forward(x, params)
    assert jnp.allclose(out, ref, atol=1e-5, rtol=1e-5), (
        float(jnp.max(jnp.abs(out - ref)))
    )
    print("KERNEL_OK")
</pallas_src>

<mosaic_0001>
module attributes {stable_mosaic.version = 11 : i64} {
  func.func @_fused_forward_kernel(%arg0: memref<8x128xf32, #tpu.memory_space<vmem>>, %arg1: memref<240x128xf32, #tpu.memory_space<vmem>>, %arg2: memref<2x10xf32, #tpu.memory_space<vmem>>) attributes {dimension_semantics = [], scalar_prefetch = 0 : i64, scratch_operands = 0 : i64, tpu.core_type = #tpu.core_type<tc>} {
    %c0 = arith.constant 0 : index
    %c0_0 = arith.constant 0 : index
    %0 = vector.load %arg0[%c0, %c0_0] : memref<8x128xf32, #tpu.memory_space<vmem>>, vector<8x128xf32>
    %c0_1 = arith.constant 0 : index
    %c0_2 = arith.constant 0 : index
    %1 = vector.load %arg1[%c0_1, %c0_2] : memref<240x128xf32, #tpu.memory_space<vmem>>, vector<8x8xf32>
    %cst = arith.constant dense<0.000000e+00> : vector<8x128xf32>
    %2 = tpu.matmul %1, %0, %cst {dimension_numbers = #tpu.dot_dimension_numbers<[1], [0], [0], [1], [0, 0, 1, 1], [], []>} : vector<8x8xf32>, vector<8x128xf32>, vector<8x128xf32> -> vector<8x128xf32>
    %c8 = arith.constant 8 : index
    %c0_3 = arith.constant 0 : index
    %3 = vector.load %arg1[%c8, %c0_3] : memref<240x128xf32, #tpu.memory_space<vmem>>, vector<8x8xf32>
    %c127_i32 = arith.constant 127 : i32
    %4 = tpu.dynamic_rotate %0 by %c127_i32 dim 1 : vector<8x128xf32>, i32 -> vector<8x128xf32>
    %cst_4 = arith.constant dense<0.000000e+00> : vector<8x128xf32>
    %5 = tpu.matmul %3, %4, %cst_4 {dimension_numbers = #tpu.dot_dimension_numbers<[1], [0], [0], [1], [0, 0, 1, 1], [], []>} : vector<8x8xf32>, vector<8x128xf32>, vector<8x128xf32> -> vector<8x128xf32>
    %6 = arith.addf %2, %5 : vector<8x128xf32>
    %c16 = arith.constant 16 : index
    %c0_5 = arith.constant 0 : index
    %7 = vector.load %arg1[%c16, %c0_5] : memref<240x128xf32, #tpu.memory_space<vmem>>, vector<8x8xf32>
    %c126_i32 = arith.constant 126 : i32
    %8 = tpu.dynamic_rotate %0 by %c126_i32 dim 1 : vector<8x128xf32>, i32 -> vector<8x128xf32>
    %cst_6 = arith.constant dense<0.000000e+00> : vector<8x128xf32>
    %9 = tpu.matmul %7, %8, %cst_6 {dimension_numbers = #tpu.dot_dimension_numbers<[1], [0], [0], [1], [0, 0, 1, 1], [], []>} : vector<8x8xf32>, vector<8x128xf32>, vector<8x128xf32> -> vector<8x128xf32>
    %10 = arith.addf %6, %9 : vector<8x128xf32>
    %c24 = arith.constant 24 : index
    %c0_7 = arith.constant 0 : index
    %11 = vector.load %arg1[%c24, %c0_7] : memref<240x128xf32, #tpu.memory_space<vmem>>, vector<8x128xf32>
    %12 = arith.addf %10, %11 : vector<8x128xf32>
    %cst_8 = arith.constant 0.000000e+00 : f32
    %13 = vector.broadcast %cst_8 : f32 to vector<8x128xf32>
    %14 = arith.maximumf %12, %13 : vector<8x128xf32>
    %c32 = arith.constant 32 : index
    %c0_9 = arith.constant 0 : index
    %15 = vector.load %arg1[%c32, %c0_9] : memref<240x128xf32, #tpu.memory_space<vmem>>, vector<8x8xf32>
    %cst_10 = arith.constant dense<0.000000e+00> : vector<8x128xf32>
    %16 = tpu.matmul %15, %14, %cst_10 {dimension_numbers = #tpu.dot_dimension_numbers<[1], [0], [0], [1], [0, 0, 1, 1], [], []>} : vector<8x8xf32>, vector<8x128xf32>, vector<8x128xf32> -> vector<8x128xf32>
    %c40 = arith.constant 40 : index
    %c0_11 = arith.constant 0 : index
    %17 = vector.load %arg1[%c40, %c0_11] : memref<240x128xf32, #tpu.memory_space<vmem>>, vector<8x8xf32>
    %c127_i32_12 = arith.constant 127 : i32
    %18 = tpu.dynamic_rotate %14 by %c127_i32_12 dim 1 : vector<8x128xf32>, i32 -> vector<8x128xf32>
    %cst_13 = arith.constant dense<0.000000e+00> : vector<8x128xf32>
    %19 = tpu.matmul %17, %18, %cst_13 {dimension_numbers = #tpu.dot_dimension_numbers<[1], [0], [0], [1], [0, 0, 1, 1], [], []>} : vector<8x8xf32>, vector<8x128xf32>, vector<8x128xf32> -> vector<8x128xf32>
    %20 = arith.addf %16, %19 : vector<8x128xf32>
    %c48 = arith.constant 48 : index
    %c0_14 = arith.constant 0 : index
    %21 = vector.load %arg1[%c48, %c0_14] : memref<240x128xf32, #tpu.memory_space<vmem>>, vector<8x8xf32>
    %c126_i32_15 = arith.constant 126 : i32
    %22 = tpu.dynamic_rotate %14 by %c126_i32_15 dim 1 : vector<8x128xf32>, i32 -> vector<8x128xf32>
    %cst_16 = arith.constant dense<0.000000e+00> : vector<8x128xf32>
    %23 = tpu.matmul %21, %22, %cst_16 {dimension_numbers = #tpu.dot_dimension_numbers<[1], [0], [0], [1], [0, 0, 1, 1], [], []>} : vector<8x8xf32>, vector<8x128xf32>, vector<8x128xf32> -> vector<8x128xf32>
    %24 = arith.addf %20, %23 : vector<8x128xf32>
    %c56 = arith.constant 56 : index
    %c0_17 = arith.constant 0 : index
    %25 = vector.load %arg1[%c56, %c0_17] : memref<240x128xf32, #tpu.memory_space<vmem>>, vector<8x128xf32>
    %26 = arith.addf %24, %25 : vector<8x128xf32>
    %cst_18 = arith.constant 0.000000e+00 : f32
    %27 = vector.broadcast %cst_18 : f32 to vector<8x128xf32>
    %28 = arith.maximumf %26, %27 : vector<8x128xf32>
    %c64 = arith.constant 64 : index
    %c0_19 = arith.constant 0 : index
    %29 = vector.load %arg1[%c64, %c0_19] : memref<240x128xf32, #tpu.memory_space<vmem>>, vector<16x32xf32>
    %30 = vector.extract_strided_slice %28 {offsets = [0, 0], sizes = [1, 16], strides = [1, 1]} : vector<8x128xf32> to vector<1x16xf32>
    %cst_20 = arith.constant dense<0.000000e+00> : vector<1x32xf32>
    %31 = tpu.matmul %30, %29, %cst_20 {dimension_numbers = #tpu.dot_dimension_numbers<[1], [0], [0], [1], [0, 0, 1, 1], [], []>} : vector<1x16xf32>, vector<16x32xf32>, vector<1x32xf32> -> vector<1x32xf32>
    %c80 = arith.constant 80 : index
    %c0_21 = arith.constant 0 : index
    %32 = vector.load %arg1[%c80, %c0_21] : memref<240x128xf32, #tpu.memory_space<vmem>>, vector<16x32xf32>
    %33 = vector.extract_strided_slice %28 {offsets = [1, 0], sizes = [1, 16], strides = [1, 1]} : vector<8x128xf32> to vector<1x16xf32>
    %cst_22 = arith.constant dense<0.000000e+00> : vector<1x32xf32>
    %34 = tpu.matmul %33, %32, %cst_22 {dimension_numbers = #tpu.dot_dimension_numbers<[1], [0], [0], [1], [0, 0, 1, 1], [], []>} : vector<1x16xf32>, vector<16x32xf32>, vector<1x32xf32> -> vector<1x32xf32>
    %35 = arith.addf %31, %34 : vector<1x32xf32>
    %c96 = arith.constant 96 : index
    %c0_23 = arith.constant 0 : index
    %36 = vector.load %arg1[%c96, %c0_23] : memref<240x128xf32, #tpu.memory_space<vmem>>, vector<16x32xf32>
    %37 = vector.extract_strided_slice %28 {offsets = [2, 0], sizes = [1, 16], strides = [1, 1]} : vector<8x128xf32> to vector<1x16xf32>
    %cst_24 = arith.constant dense<0.000000e+00> : vector<1x32xf32>
    %38 = tpu.matmul %37, %36, %cst_24 {dimension_numbers = #tpu.dot_dimension_numbers<[1], [0], [0], [1], [0, 0, 1, 1], [], []>} : vector<1x16xf32>, vector<16x32xf32>, vector<1x32xf32> -> vector<1x32xf32>
    %39 = arith.addf %35, %38 : vector<1x32xf32>
    %c112 = arith.constant 112 : index
    %c0_25 = arith.constant 0 : index
    %40 = vector.load %arg1[%c112, %c0_25] : memref<240x128xf32, #tpu.memory_space<vmem>>, vector<16x32xf32>
    %41 = vector.extract_strided_slice %28 {offsets = [3, 0], sizes = [1, 16], strides = [1, 1]} : vector<8x128xf32> to vector<1x16xf32>
    %cst_26 = arith.constant dense<0.000000e+00> : vector<1x32xf32>
    %42 = tpu.matmul %41, %40, %cst_26 {dimension_numbers = #tpu.dot_dimension_numbers<[1], [0], [0], [1], [0, 0, 1, 1], [], []>} : vector<1x16xf32>, vector<16x32xf32>, vector<1x32xf32> -> vector<1x32xf32>
    %43 = arith.addf %39, %42 : vector<1x32xf32>
    %c128 = arith.constant 128 : index
    %c0_27 = arith.constant 0 : index
    %44 = vector.load %arg1[%c128, %c0_27] : memref<240x128xf32, #tpu.memory_space<vmem>>, vector<16x32xf32>
    %45 = vector.extract_strided_slice %28 {offsets = [4, 0], sizes = [1, 16], strides = [1, 1]} : vector<8x128xf32> to vector<1x16xf32>
    %cst_28 = arith.constant dense<0.000000e+00> : vector<1x32xf32>
    %46 = tpu.matmul %45, %44, %cst_28 {dimension_numbers = #tpu.dot_dimension_numbers<[1], [0], [0], [1], [0, 0, 1, 1], [], []>} : vector<1x16xf32>, vector<16x32xf32>, vector<1x32xf32> -> vector<1x32xf32>
    %47 = arith.addf %43, %46 : vector<1x32xf32>
    %c144 = arith.constant 144 : index
    %c0_29 = arith.constant 0 : index
    %48 = vector.load %arg1[%c144, %c0_29] : memref<240x128xf32, #tpu.memory_space<vmem>>, vector<16x32xf32>
    %49 = vector.extract_strided_slice %28 {offsets = [5, 0], sizes = [1, 16], strides = [1, 1]} : vector<8x128xf32> to vector<1x16xf32>
    %cst_30 = arith.constant dense<0.000000e+00> : vector<1x32xf32>
    %50 = tpu.matmul %49, %48, %cst_30 {dimension_numbers = #tpu.dot_dimension_numbers<[1], [0], [0], [1], [0, 0, 1, 1], [], []>} : vector<1x16xf32>, vector<16x32xf32>, vector<1x32xf32> -> vector<1x32xf32>
    %51 = arith.addf %47, %50 : vector<1x32xf32>
    %c160 = arith.constant 160 : index
    %c0_31 = arith.constant 0 : index
    %52 = vector.load %arg1[%c160, %c0_31] : memref<240x128xf32, #tpu.memory_space<vmem>>, vector<16x32xf32>
    %53 = vector.extract_strided_slice %28 {offsets = [6, 0], sizes = [1, 16], strides = [1, 1]} : vector<8x128xf32> to vector<1x16xf32>
    %cst_32 = arith.constant dense<0.000000e+00> : vector<1x32xf32>
    %54 = tpu.matmul %53, %52, %cst_32 {dimension_numbers = #tpu.dot_dimension_numbers<[1], [0], [0], [1], [0, 0, 1, 1], [], []>} : vector<1x16xf32>, vector<16x32xf32>, vector<1x32xf32> -> vector<1x32xf32>
    %55 = arith.addf %51, %54 : vector<1x32xf32>
    %c176 = arith.constant 176 : index
    %c0_33 = arith.constant 0 : index
    %56 = vector.load %arg1[%c176, %c0_33] : memref<240x128xf32, #tpu.memory_space<vmem>>, vector<16x32xf32>
    %57 = vector.extract_strided_slice %28 {offsets = [7, 0], sizes = [1, 16], strides = [1, 1]} : vector<8x128xf32> to vector<1x16xf32>
    %cst_34 = arith.constant dense<0.000000e+00> : vector<1x32xf32>
    %58 = tpu.matmul %57, %56, %cst_34 {dimension_numbers = #tpu.dot_dimension_numbers<[1], [0], [0], [1], [0, 0, 1, 1], [], []>} : vector<1x16xf32>, vector<16x32xf32>, vector<1x32xf32> -> vector<1x32xf32>
    %59 = arith.addf %55, %58 : vector<1x32xf32>
    %c64_35 = arith.constant 64 : index
    %c0_36 = arith.constant 0 : index
    %60 = vector.load %arg1[%c64_35, %c0_36] : memref<240x128xf32, #tpu.memory_space<vmem>>, vector<16x32xf32>
    %61 = vector.extract_strided_slice %28 {offsets = [0, 16], sizes = [1, 16], strides = [1, 1]} : vector<8x128xf32> to vector<1x16xf32>
    %cst_37 = arith.constant dense<0.000000e+00> : vector<1x32xf32>
    %62 = tpu.matmul %61, %60, %cst_37 {dimension_numbers = #tpu.dot_dimension_numbers<[1], [0], [0], [1], [0, 0, 1, 1], [], []>} : vector<1x16xf32>, vector<16x32xf32>, vector<1x32xf32> -> vector<1x32xf32>
    %c80_38 = arith.constant 80 : index
    %c0_39 = arith.constant 0 : index
    %63 = vector.load %arg1[%c80_38, %c0_39] : memref<240x128xf32, #tpu.memory_space<vmem>>, vector<16x32xf32>
    %64 = vector.extract_strided_slice %28 {offsets = [1, 16], sizes = [1, 16], strides = [1, 1]} : vector<8x128xf32> to vector<1x16xf32>
    %cst_40 = arith.constant dense<0.000000e+00> : vector<1x32xf32>
    %65 = tpu.matmul %64, %63, %cst_40 {dimension_numbers = #tpu.dot_dimension_numbers<[1], [0], [0], [1], [0, 0, 1, 1], [], []>} : vector<1x16xf32>, vector<16x32xf32>, vector<1x32xf32> -> vector<1x32xf32>
    %66 = arith.addf %62, %65 : vector<1x32xf32>
    %c96_41 = arith.constant 96 : index
    %c0_42 = arith.constant 0 : index
    %67 = vector.load %arg1[%c96_41, %c0_42] : memref<240x128xf32, #tpu.memory_space<vmem>>, vector<16x32xf32>
    %68 = vector.extract_strided_slice %28 {offsets = [2, 16], sizes = [1, 16], strides = [1, 1]} : vector<8x128xf32> to vector<1x16xf32>
    %cst_43 = arith.constant dense<0.000000e+00> : vector<1x32xf32>
    %69 = tpu.matmul %68, %67, %cst_43 {dimension_numbers = #tpu.dot_dimension_numbers<[1], [0], [0], [1], [0, 0, 1, 1], [], []>} : vector<1x16xf32>, vector<16x32xf32>, vector<1x32xf32> -> vector<1x32xf32>
    %70 = arith.addf %66, %69 : vector<1x32xf32>
    %c112_44 = arith.constant 112 : index
    %c0_45 = arith.constant 0 : index
    %71 = vector.load %arg1[%c112_44, %c0_45] : memref<240x128xf32, #tpu.memory_space<vmem>>, vector<16x32xf32>
    %72 = vector.extract_strided_slice %28 {offsets = [3, 16], sizes = [1, 16], strides = [1, 1]} : vector<8x128xf32> to vector<1x16xf32>
    %cst_46 = arith.constant dense<0.000000e+00> : vector<1x32xf32>
    %73 = tpu.matmul %72, %71, %cst_46 {dimension_numbers = #tpu.dot_dimension_numbers<[1], [0], [0], [1], [0, 0, 1, 1], [], []>} : vector<1x16xf32>, vector<16x32xf32>, vector<1x32xf32> -> vector<1x32xf32>
    %74 = arith.addf %70, %73 : vector<1x32xf32>
    %c128_47 = arith.constant 128 : index
    %c0_48 = arith.constant 0 : index
    %75 = vector.load %arg1[%c128_47, %c0_48] : memref<240x128xf32, #tpu.memory_space<vmem>>, vector<16x32xf32>
    %76 = vector.extract_strided_slice %28 {offsets = [4, 16], sizes = [1, 16], strides = [1, 1]} : vector<8x128xf32> to vector<1x16xf32>
    %cst_49 = arith.constant dense<0.000000e+00> : vector<1x32xf32>
    %77 = tpu.matmul %76, %75, %cst_49 {dimension_numbers = #tpu.dot_dimension_numbers<[1], [0], [0], [1], [0, 0, 1, 1], [], []>} : vector<1x16xf32>, vector<16x32xf32>, vector<1x32xf32> -> vector<1x32xf32>
    %78 = arith.addf %74, %77 : vector<1x32xf32>
    %c144_50 = arith.constant 144 : index
    %c0_51 = arith.constant 0 : index
    %79 = vector.load %arg1[%c144_50, %c0_51] : memref<240x128xf32, #tpu.memory_space<vmem>>, vector<16x32xf32>
    %80 = vector.extract_strided_slice %28 {offsets = [5, 16], sizes = [1, 16], strides = [1, 1]} : vector<8x128xf32> to vector<1x16xf32>
    %cst_52 = arith.constant dense<0.000000e+00> : vector<1x32xf32>
    %81 = tpu.matmul %80, %79, %cst_52 {dimension_numbers = #tpu.dot_dimension_numbers<[1], [0], [0], [1], [0, 0, 1, 1], [], []>} : vector<1x16xf32>, vector<16x32xf32>, vector<1x32xf32> -> vector<1x32xf32>
    %82 = arith.addf %78, %81 : vector<1x32xf32>
    %c160_53 = arith.constant 160 : index
    %c0_54 = arith.constant 0 : index
    %83 = vector.load %arg1[%c160_53, %c0_54] : memref<240x128xf32, #tpu.memory_space<vmem>>, vector<16x32xf32>
    %84 = vector.extract_strided_slice %28 {offsets = [6, 16], sizes = [1, 16], strides = [1, 1]} : vector<8x128xf32> to vector<1x16xf32>
    %cst_55 = arith.constant dense<0.000000e+00> : vector<1x32xf32>
    %85 = tpu.matmul %84, %83, %cst_55 {dimension_numbers = #tpu.dot_dimension_numbers<[1], [0], [0], [1], [0, 0, 1, 1], [], []>} : vector<1x16xf32>, vector<16x32xf32>, vector<1x32xf32> -> vector<1x32xf32>
    %86 = arith.addf %82, %85 : vector<1x32xf32>
    %c176_56 = arith.constant 176 : index
    %c0_57 = arith.constant 0 : index
    %87 = vector.load %arg1[%c176_56, %c0_57] : memref<240x128xf32, #tpu.memory_space<vmem>>, vector<16x32xf32>
    %88 = vector.extract_strided_slice %28 {offsets = [7, 16], sizes = [1, 16], strides = [1, 1]} : vector<8x128xf32> to vector<1x16xf32>
    %cst_58 = arith.constant dense<0.000000e+00> : vector<1x32xf32>
    %89 = tpu.matmul %88, %87, %cst_58 {dimension_numbers = #tpu.dot_dimension_numbers<[1], [0], [0], [1], [0, 0, 1, 1], [], []>} : vector<1x16xf32>, vector<16x32xf32>, vector<1x32xf32> -> vector<1x32xf32>
    %90 = arith.addf %86, %89 : vector<1x32xf32>
    %91 = tpu.concatenate %59, %90 in 0 : vector<1x32xf32>, vector<1x32xf32> -> vector<2x32xf32>
    %c192 = arith.constant 192 : index
    %c0_59 = arith.constant 0 : index
    %92 = vector.load %arg1[%c192, %c0_59] : memref<240x128xf32, #tpu.memory_space<vmem>>, vector<1x32xf32>
    %93 = vector.broadcast %92 : vector<1x32xf32> to vector<2x32xf32>
    %94 = arith.addf %91, %93 : vector<2x32xf32>
    %cst_60 = arith.constant 0.000000e+00 : f32
    %95 = vector.broadcast %cst_60 : f32 to vector<2x32xf32>
    %96 = arith.maximumf %94, %95 : vector<2x32xf32>
    %c200 = arith.constant 200 : index
    %c0_61 = arith.constant 0 : index
    %97 = vector.load %arg1[%c200, %c0_61] : memref<240x128xf32, #tpu.memory_space<vmem>>, vector<32x10xf32>
    %cst_62 = arith.constant dense<0.000000e+00> : vector<2x10xf32>
    %98 = tpu.matmul %96, %97, %cst_62 {dimension_numbers = #tpu.dot_dimension_numbers<[1], [0], [0], [1], [0, 0, 1, 1], [], []>} : vector<2x32xf32>, vector<32x10xf32>, vector<2x10xf32> -> vector<2x10xf32>
    %c232 = arith.constant 232 : index
    %c0_63 = arith.constant 0 : index
    %99 = vector.load %arg1[%c232, %c0_63] : memref<240x128xf32, #tpu.memory_space<vmem>>, vector<1x10xf32>
    %100 = vector.broadcast %99 : vector<1x10xf32> to vector<2x10xf32>
    %101 = arith.addf %98, %100 : vector<2x10xf32>
    %c0_64 = arith.constant 0 : index
    %c0_65 = arith.constant 0 : index
    %102 = vector.load %arg2[%c0_64, %c0_65] : memref<2x10xf32, #tpu.memory_space<vmem>>, vector<2x10xf32>
    tpu.vector_store %arg2[%c0_64, %c0_65], %101 {strides = array<i32>} : memref<2x10xf32, #tpu.memory_space<vmem>>, vector<2x10xf32>,
    return
  }
}

</mosaic_0001>

<llo_original>
// kernel: convnn_forward.1
$region0: #{convnn_forward.1}
  #allocation0 [shape = 'u32[]', space=smem, size = 0x4, offset = 0x4, fixed_abs, tag = 'smem constant byte address 0x4 - core index']
  #allocation1 [shape = 'u32[144,128]{1,0:T(1,128)}', space=vmem, size = 0x12000, scoped, tag = 'internal scratch']
  %s0 = inlined_call_operand.vmem [shape: f32[8,128], index: 0, kind: input, shape index: {}]
  %s1 = inlined_call_operand.vmem [shape: f32[240,128], index: 1, kind: input, shape index: {}]
  %s2 = inlined_call_operand.hbm [shape: f32[2,10], index: 2, kind: output, shape index: {}]
  %s3 = sld [smem:[#allocation0]]
  $region18: #{convnn_forward.1} parent=0
    _
  %s5 = ssub.s32 1, %s3
  %s6 = scalar_select 0, %s5, %s3
  $region1: #{convnn_forward.1} parent=0
    #allocation2 [shape = 'u8[1024]{0}', space=vmem, size = 0x400, scoped, tag = 'output window, operand 0, single buffered']
    #allocation3 [shape = 's32[1]{0}', space=sflag, size = 0x4, scoped, tag = 'scoped memory for convnn_forward.1']
    %7 = vsyncpa [#allocation3], 0
    // Predicated region
    $region2: #{convnn_forward.1} parent=1 // pred_check
      _
    $region3: #{convnn_forward.1} parent=1 // pred_check_branch
      %9 = sbr.rel (0) target = $region5
    $region4: #{convnn_forward.1} parent=1 // pred_region
      _
    $region5: #{convnn_forward.1} parent=1 // pred_fallthru
      _
    // Predicated region
    $region6: #{convnn_forward.1} parent=1 // pred_check
      _
    $region7: #{convnn_forward.1} parent=1 // pred_check_branch
      %11 = sbr.rel (0) target = $region9
    $region8: #{convnn_forward.1} parent=1 // pred_region
      _
    $region9: #{convnn_forward.1} parent=1 // pred_fallthru
      _
    %v12 = vld [vmem:[%s0] sm:$0xff]
    %v13 = vld [vmem:[%s1] sm:$0xff]
    %v14 = vld [vmem:[%s1 + $0x8] sm:$0xff]
    %15 = vrot.lane.b32.xlu0 %v12, 127
    %v16 = vpop.permute.xlu0 %15
    %vm17 = vcmask 64512
    %v19 = vsel %vm17, %v14, 0
    %21 = vmatprep.subr.mxu0 0.0
    %22 = vmatpush1.msra.mxu0 %v16
    %23 = vmatprep.subr.mxu0 0.0
    %24 = vmatpush1.msra.mxu0 0.0
    %25 = vmatprep.subr.mxu0 0.0
    %26 = vmatpush1.msra.mxu0 0.0
    %27 = vmatprep.subr.mxu0 0.0
    %28 = vmatpush1.msra.mxu0 0.0
    %29 = vmatprep.subr.mxu0 0.0
    %30 = vmatpush1.msra.mxu0 0.0
    %31 = vmatprep.subr.mxu0 0.0
    %32 = vmatpush1.msra.mxu0 0.0
    %33 = vmatprep.subr.mxu0 0.0
    %34 = vmatpush1.msra.mxu0 0.0
    %35 = vmatprep.subr.mxu0 0.0
    %36 = vmatpush1.msra.mxu0 0.0
    %37 = vmatprep.subr.mxu0 0.0
    %38 = vmatpush1.msra.mxu0 0.0
    %39 = vmatprep.subr.mxu0 0.0
    %40 = vmatpush1.msra.mxu0 0.0
    %41 = vmatprep.subr.mxu0 0.0
    %42 = vmatpush1.msra.mxu0 0.0
    %43 = vmatprep.subr.mxu0 0.0
    %44 = vmatpush1.msra.mxu0 0.0
    %45 = vmatprep.subr.mxu0 0.0
    %46 = vmatpush1.msra.mxu0 0.0
    %47 = vmatprep.subr.mxu0 0.0
    %48 = vmatpush1.msra.mxu0 0.0
    %49 = vmatprep.subr.mxu0 0.0
    %50 = vmatpush1.msra.mxu0 0.0
    %51 = vmatprep.subr.mxu0 0.0
    %52 = vmatpush1.msra.mxu0 0.0
    %53 = vmatprep.subr.mxu0 0.0
    %54 = vmatpush1.msra.mxu0 0.0
    %55 = vmatprep.subr.mxu0 0.0
    %56 = vmatpush1.msra.mxu0 0.0
    %57 = vmatprep.subr.mxu0 0.0
    %58 = vmatpush1.msra.mxu0 0.0
    %59 = vmatprep.subr.mxu0 0.0
    %60 = vmatpush1.msra.mxu0 0.0
    %61 = vmatprep.subr.mxu0 0.0
    %62 = vmatpush1.msra.mxu0 0.0
    %63 = vmatprep.subr.mxu0 0.0
    %64 = vmatpush1.msra.mxu0 0.0
    %65 = vmatprep.subr.mxu0 0.0
    %66 = vmatpush1.msra.mxu0 0.0
    %67 = vmatprep.subr.mxu0 0.0
    %68 = vmatpush1.msra.mxu0 0.0
    %69 = vmatprep.subr.mxu0 0.0
    %70 = vmatpush1.msra.mxu0 0.0
    %71 = vmatprep.subr.mxu0 0.0
    %72 = vmatpush1.msra.mxu0 0.0
    %73 = vmatprep.subr.mxu0 0.0
    %74 = vmatpush1.msra.mxu0 0.0
    %75 = vmatprep.subr.mxu0 0.0
    %76 = vmatpush1.msra.mxu0 0.0
    %77 = vmatprep.subr.mxu0 0.0
    %78 = vmatpush1.msra.mxu0 0.0
    %79 = vmatprep.subr.mxu0 0.0
    %80 = vmatpush1.msra.mxu0 0.0
    %81 = vmatprep.subr.mxu0 0.0
    %82 = vmatpush1.msra.mxu0 0.0
    %83 = vmatprep.subr.mxu0 0.0
    %84 = vmatpush1.msra.mxu0 0.0
    %85 = vmatprep.mubr.f32.mxu0 0.0
    %86 = vmatmul.mubr.f32.gmra.mrb[0].mxu0 %v19
    %v87 = vpop.f32.mrb[0].mxu0
    %v88 = vadd.f32 0.0, %v87
    %v89 = vpop.f32.mrb[0].mxu0
    %90 = vdwg.mxu0
    %v92 = vsel %vm17, %v13, 0
    %94 = vmatprep.subr.mxu0 0.0
    %95 = vmatpush1.msra.mxu0 %v12
    %96 = vmatprep.subr.mxu0 0.0
    %97 = vmatpush1.msra.mxu0 0.0
    %98 = vmatprep.subr.mxu0 0.0
    %99 = vmatpush1.msra.mxu0 0.0
    %100 = vmatprep.subr.mxu0 0.0
    %101 = vmatpush1.msra.mxu0 0.0
    %102 = vmatprep.subr.mxu0 0.0
    %103 = vmatpush1.msra.mxu0 0.0
    %104 = vmatprep.subr.mxu0 0.0
    %105 = vmatpush1.msra.mxu0 0.0
    %106 = vmatprep.subr.mxu0 0.0
    %107 = vmatpush1.msra.mxu0 0.0
    %108 = vmatprep.subr.mxu0 0.0
    %109 = vmatpush1.msra.mxu0 0.0
    %110 = vmatprep.subr.mxu0 0.0
    %111 = vmatpush1.msra.mxu0 0.0
    %112 = vmatprep.subr.mxu0 0.0
    %113 = vmatpush1.msra.mxu0 0.0
    %114 = vmatprep.subr.mxu0 0.0
    %115 = vmatpush1.msra.mxu0 0.0
    %116 = vmatprep.subr.mxu0 0.0
    %117 = vmatpush1.msra.mxu0 0.0
    %118 = vmatprep.subr.mxu0 0.0
    %119 = vmatpush1.msra.mxu0 0.0
    %120 = vmatprep.subr.mxu0 0.0
    %121 = vmatpush1.msra.mxu0 0.0
    %122 = vmatprep.subr.mxu0 0.0
    %123 = vmatpush1.msra.mxu0 0.0
    %124 = vmatprep.subr.mxu0 0.0
    %125 = vmatpush1.msra.mxu0 0.0
    %126 = vmatprep.subr.mxu0 0.0
    %127 = vmatpush1.msra.mxu0 0.0
    %128 = vmatprep.subr.mxu0 0.0
    %129 = vmatpush1.msra.mxu0 0.0
    %130 = vmatprep.subr.mxu0 0.0
    %131 = vmatpush1.msra.mxu0 0.0
    %132 = vmatprep.subr.mxu0 0.0
    %133 = vmatpush1.msra.mxu0 0.0
    %134 = vmatprep.subr.mxu0 0.0
    %135 = vmatpush1.msra.mxu0 0.0
    %136 = vmatprep.subr.mxu0 0.0
    %137 = vmatpush1.msra.mxu0 0.0
    %138 = vmatprep.subr.mxu0 0.0
    %139 = vmatpush1.msra.mxu0 0.0
    %140 = vmatprep.subr.mxu0 0.0
    %141 = vmatpush1.msra.mxu0 0.0
    %142 = vmatprep.subr.mxu0 0.0
    %143 = vmatpush1.msra.mxu0 0.0
    %144 = vmatprep.subr.mxu0 0.0
    %145 = vmatpush1.msra.mxu0 0.0
    %146 = vmatprep.subr.mxu0 0.0
    %147 = vmatpush1.msra.mxu0 0.0
    %148 = vmatprep.subr.mxu0 0.0
    %149 = vmatpush1.msra.mxu0 0.0
    %150 = vmatprep.subr.mxu0 0.0
    %151 = vmatpush1.msra.mxu0 0.0
    %152 = vmatprep.subr.mxu0 0.0
    %153 = vmatpush1.msra.mxu0 0.0
    %154 = vmatprep.subr.mxu0 0.0
    %155 = vmatpush1.msra.mxu0 0.0
    %156 = vmatprep.subr.mxu0 0.0
    %157 = vmatpush1.msra.mxu0 0.0
    %158 = vmatprep.mubr.f32.mxu0 0.0
    %159 = vmatmul.mubr.f32.gmra.mrb[0].mxu0 %v92
    %v160 = vpop.f32.mrb[0].mxu0
    %v161 = vadd.f32 %v88, %v160
    %v162 = vpop.f32.mrb[0].mxu0
    %163 = vdwg.mxu0
    %v164 = vld [vmem:[%s1 + $0x10] sm:$0xff]
    %165 = vrot.lane.b32.xlu0 %v12, 126
    %v166 = vpop.permute.xlu0 %165
    %v168 = vsel %vm17, %v164, 0
    %170 = vmatprep.subr.mxu0 0.0
    %171 = vmatpush1.msra.mxu0 %v166
    %172 = vmatprep.subr.mxu0 0.0
    %173 = vmatpush1.msra.mxu0 0.0
    %174 = vmatprep.subr.mxu0 0.0
    %175 = vmatpush1.msra.mxu0 0.0
    %176 = vmatprep.subr.mxu0 0.0
    %177 = vmatpush1.msra.mxu0 0.0
    %178 = vmatprep.subr.mxu0 0.0
    %179 = vmatpush1.msra.mxu0 0.0
    %180 = vmatprep.subr.mxu0 0.0
    %181 = vmatpush1.msra.mxu0 0.0
    %182 = vmatprep.subr.mxu0 0.0
    %183 = vmatpush1.msra.mxu0 0.0
    %184 = vmatprep.subr.mxu0 0.0
    %185 = vmatpush1.msra.mxu0 0.0
    %186 = vmatprep.subr.mxu0 0.0
    %187 = vmatpush1.msra.mxu0 0.0
    %188 = vmatprep.subr.mxu0 0.0
    %189 = vmatpush1.msra.mxu0 0.0
    %190 = vmatprep.subr.mxu0 0.0
    %191 = vmatpush1.msra.mxu0 0.0
    %192 = vmatprep.subr.mxu0 0.0
    %193 = vmatpush1.msra.mxu0 0.0
    %194 = vmatprep.subr.mxu0 0.0
    %195 = vmatpush1.msra.mxu0 0.0
    %196 = vmatprep.subr.mxu0 0.0
    %197 = vmatpush1.msra.mxu0 0.0
    %198 = vmatprep.subr.mxu0 0.0
    %199 = vmatpush1.msra.mxu0 0.0
    %200 = vmatprep.subr.mxu0 0.0
    %201 = vmatpush1.msra.mxu0 0.0
    %202 = vmatprep.subr.mxu0 0.0
    %203 = vmatpush1.msra.mxu0 0.0
    %204 = vmatprep.subr.mxu0 0.0
    %205 = vmatpush1.msra.mxu0 0.0
    %206 = vmatprep.subr.mxu0 0.0
    %207 = vmatpush1.msra.mxu0 0.0
    %208 = vmatprep.subr.mxu0 0.0
    %209 = vmatpush1.msra.mxu0 0.0
    %210 = vmatprep.subr.mxu0 0.0
    %211 = vmatpush1.msra.mxu0 0.0
    %212 = vmatprep.subr.mxu0 0.0
    %213 = vmatpush1.msra.mxu0 0.0
    %214 = vmatprep.subr.mxu0 0.0
    %215 = vmatpush1.msra.mxu0 0.0
    %216 = vmatprep.subr.mxu0 0.0
    %217 = vmatpush1.msra.mxu0 0.0
    %218 = vmatprep.subr.mxu0 0.0
    %219 = vmatpush1.msra.mxu0 0.0
    %220 = vmatprep.subr.mxu0 0.0
    %221 = vmatpush1.msra.mxu0 0.0
    %222 = vmatprep.subr.mxu0 0.0
    %223 = vmatpush1.msra.mxu0 0.0
    %224 = vmatprep.subr.mxu0 0.0
    %225 = vmatpush1.msra.mxu0 0.0
    %226 = vmatprep.subr.mxu0 0.0
    %227 = vmatpush1.msra.mxu0 0.0
    %228 = vmatprep.subr.mxu0 0.0
    %229 = vmatpush1.msra.mxu0 0.0
    %230 = vmatprep.subr.mxu0 0.0
    %231 = vmatpush1.msra.mxu0 0.0
    %232 = vmatprep.subr.mxu0 0.0
    %233 = vmatpush1.msra.mxu0 0.0
    %234 = vmatprep.mubr.f32.mxu0 0.0
    %235 = vmatmul.mubr.f32.gmra.mrb[0].mxu0 %v168
    %v236 = vpop.f32.mrb[0].mxu0
    %v237 = vadd.f32 0.0, %v236
    %v238 = vpop.f32.mrb[0].mxu0
    %239 = vdwg.mxu0
    %v240 = vadd.f32 %v161, %v237
    %v241 = vld [vmem:[%s1 + $0x18] sm:$0xff]
    %v242 = vadd.f32 %v240, %v241
    %v243 = vmax.f32 %v242, 0.0
    %v244 = vld [vmem:[%s1 + $0x20] sm:$0xff]
    %v245 = vld [vmem:[%s1 + $0x28] sm:$0xff]
    %246 = vrot.lane.b32.xlu0 %v243, 127
    %v247 = vpop.permute.xlu0 %246
    %v249 = vsel %vm17, %v245, 0
    %251 = vmatprep.subr.mxu0 0.0
    %252 = vmatpush1.msra.mxu0 %v247
    %253 = vmatprep.subr.mxu0 0.0
    %254 = vmatpush1.msra.mxu0 0.0
    %255 = vmatprep.subr.mxu0 0.0
    %256 = vmatpush1.msra.mxu0 0.0
    %257 = vmatprep.subr.mxu0 0.0
    %258 = vmatpush1.msra.mxu0 0.0
    %259 = vmatprep.subr.mxu0 0.0
    %260 = vmatpush1.msra.mxu0 0.0
    %261 = vmatprep.subr.mxu0 0.0
    %262 = vmatpush1.msra.mxu0 0.0
    %263 = vmatprep.subr.mxu0 0.0
    %264 = vmatpush1.msra.mxu0 0.0
    %265 = vmatprep.subr.mxu0 0.0
    %266 = vmatpush1.msra.mxu0 0.0
    %267 = vmatprep.subr.mxu0 0.0
    %268 = vmatpush1.msra.mxu0 0.0
    %269 = vmatprep.subr.mxu0 0.0
    %270 = vmatpush1.msra.mxu0 0.0
    %271 = vmatprep.subr.mxu0 0.0
    %272 = vmatpush1.msra.mxu0 0.0
    %273 = vmatprep.subr.mxu0 0.0
    %274 = vmatpush1.msra.mxu0 0.0
    %275 = vmatprep.subr.mxu0 0.0
    %276 = vmatpush1.msra.mxu0 0.0
    %277 = vmatprep.subr.mxu0 0.0
    %278 = vmatpush1.msra.mxu0 0.0
    %279 = vmatprep.subr.mxu0 0.0
    %280 = vmatpush1.msra.mxu0 0.0
    %281 = vmatprep.subr.mxu0 0.0
    %282 = vmatpush1.msra.mxu0 0.0
    %283 = vmatprep.subr.mxu0 0.0
    %284 = vmatpush1.msra.mxu0 0.0
    %285 = vmatprep.subr.mxu0 0.0
    %286 = vmatpush1.msra.mxu0 0.0
    %287 = vmatprep.subr.mxu0 0.0
    %288 = vmatpush1.msra.mxu0 0.0
    %289 = vmatprep.subr.mxu0 0.0
    %290 = vmatpush1.msra.mxu0 0.0
    %291 = vmatprep.subr.mxu0 0.0
    %292 = vmatpush1.msra.mxu0 0.0
    %293 = vmatprep.subr.mxu0 0.0
    %294 = vmatpush1.msra.mxu0 0.0
    %295 = vmatprep.subr.mxu0 0.0
    %296 = vmatpush1.msra.mxu0 0.0
    %297 = vmatprep.subr.mxu0 0.0
    %298 = vmatpush1.msra.mxu0 0.0
    %299 = vmatprep.subr.mxu0 0.0
    %300 = vmatpush1.msra.mxu0 0.0
    %301 = vmatprep.subr.mxu0 0.0
    %302 = vmatpush1.msra.mxu0 0.0
    %303 = vmatprep.subr.mxu0 0.0
    %304 = vmatpush1.msra.mxu0 0.0
    %305 = vmatprep.subr.mxu0 0.0
    %306 = vmatpush1.msra.mxu0 0.0
    %307 = vmatprep.subr.mxu0 0.0
    %308 = vmatpush1.msra.mxu0 0.0
    %309 = vmatprep.subr.mxu0 0.0
    %310 = vmatpush1.msra.mxu0 0.0
    %311 = vmatprep.subr.mxu0 0.0
    %312 = vmatpush1.msra.mxu0 0.0
    %313 = vmatprep.subr.mxu0 0.0
    %314 = vmatpush1.msra.mxu0 0.0
    %315 = vmatprep.mubr.f32.mxu0 0.0
    %316 = vmatmul.mubr.f32.gmra.mrb[0].mxu0 %v249
    %v317 = vpop.f32.mrb[0].mxu0
    %v318 = vadd.f32 0.0, %v317
    %v319 = vpop.f32.mrb[0].mxu0
    %320 = vdwg.mxu0
    %v322 = vsel %vm17, %v244, 0
    %324 = vmatprep.subr.mxu0 0.0
    %325 = vmatpush1.msra.mxu0 %v243
    %326 = vmatprep.subr.mxu0 0.0
    %327 = vmatpush1.msra.mxu0 0.0
    %328 = vmatprep.subr.mxu0 0.0
    %329 = vmatpush1.msra.mxu0 0.0
    %330 = vmatprep.subr.mxu0 0.0
    %331 = vmatpush1.msra.mxu0 0.0
    %332 = vmatprep.subr.mxu0 0.0
    %333 = vmatpush1.msra.mxu0 0.0
    %334 = vmatprep.subr.mxu0 0.0
    %335 = vmatpush1.msra.mxu0 0.0
    %336 = vmatprep.subr.mxu0 0.0
    %337 = vmatpush1.msra.mxu0 0.0
    %338 = vmatprep.subr.mxu0 0.0
    %339 = vmatpush1.msra.mxu0 0.0
    %340 = vmatprep.subr.mxu0 0.0
    %341 = vmatpush1.msra.mxu0 0.0
    %342 = vmatprep.subr.mxu0 0.0
    %343 = vmatpush1.msra.mxu0 0.0
    %344 = vmatprep.subr.mxu0 0.0
    %345 = vmatpush1.msra.mxu0 0.0
    %346 = vmatprep.subr.mxu0 0.0
    %347 = vmatpush1.msra.mxu0 0.0
    %348 = vmatprep.subr.mxu0 0.0
    %349 = vmatpush1.msra.mxu0 0.0
    %350 = vmatprep.subr.mxu0 0.0
    %351 = vmatpush1.msra.mxu0 0.0
    %352 = vmatprep.subr.mxu0 0.0
    %353 = vmatpush1.msra.mxu0 0.0
    %354 = vmatprep.subr.mxu0 0.0
    %355 = vmatpush1.msra.mxu0 0.0
    %356 = vmatprep.subr.mxu0 0.0
    %357 = vmatpush1.msra.mxu0 0.0
    %358 = vmatprep.subr.mxu0 0.0
    %359 = vmatpush1.msra.mxu0 0.0
    %360 = vmatprep.subr.mxu0 0.0
    %361 = vmatpush1.msra.mxu0 0.0
    %362 = vmatprep.subr.mxu0 0.0
    %363 = vmatpush1.msra.mxu0 0.0
    %364 = vmatprep.subr.mxu0 0.0
    %365 = vmatpush1.msra.mxu0 0.0
    %366 = vmatprep.subr.mxu0 0.0
    %367 = vmatpush1.msra.mxu0 0.0
    %368 = vmatprep.subr.mxu0 0.0
    %369 = vmatpush1.msra.mxu0 0.0
    %370 = vmatprep.subr.mxu0 0.0
    %371 = vmatpush1.msra.mxu0 0.0
    %372 = vmatprep.subr.mxu0 0.0
    %373 = vmatpush1.msra.mxu0 0.0
    %374 = vmatprep.subr.mxu0 0.0
    %375 = vmatpush1.msra.mxu0 0.0
    %376 = vmatprep.subr.mxu0 0.0
    %377 = vmatpush1.msra.mxu0 0.0
    %378 = vmatprep.subr.mxu0 0.0
    %379 = vmatpush1.msra.mxu0 0.0
    %380 = vmatprep.subr.mxu0 0.0
    %381 = vmatpush1.msra.mxu0 0.0
    %382 = vmatprep.subr.mxu0 0.0
    %383 = vmatpush1.msra.mxu0 0.0
    %384 = vmatprep.subr.mxu0 0.0
    %385 = vmatpush1.msra.mxu0 0.0
    %386 = vmatprep.subr.mxu0 0.0
    %387 = vmatpush1.msra.mxu0 0.0
    %388 = vmatprep.mubr.f32.mxu0 0.0
    %389 = vmatmul.mubr.f32.gmra.mrb[0].mxu0 %v322
    %v390 = vpop.f32.mrb[0].mxu0
    %v391 = vadd.f32 %v318, %v390
    %v392 = vpop.f32.mrb[0].mxu0
    %393 = vdwg.mxu0
    %v394 = vld [vmem:[%s1 + $0x30] sm:$0xff]
    %395 = vrot.lane.b32.xlu0 %v243, 126
    %v396 = vpop.permute.xlu0 %395
    %v398 = vsel %vm17, %v394, 0
    %400 = vmatprep.subr.mxu0 0.0
    %401 = vmatpush1.msra.mxu0 %v396
    %402 = vmatprep.subr.mxu0 0.0
    %403 = vmatpush1.msra.mxu0 0.0
    %404 = vmatprep.subr.mxu0 0.0
    %405 = vmatpush1.msra.mxu0 0.0
    %406 = vmatprep.subr.mxu0 0.0
    %407 = vmatpush1.msra.mxu0 0.0
    %408 = vmatprep.subr.mxu0 0.0
    %409 = vmatpush1.msra.mxu0 0.0
    %410 = vmatprep.subr.mxu0 0.0
    %411 = vmatpush1.msra.mxu0 0.0
    %412 = vmatprep.subr.mxu0 0.0
    %413 = vmatpush1.msra.mxu0 0.0
    %414 = vmatprep.subr.mxu0 0.0
    %415 = vmatpush1.msra.mxu0 0.0
    %416 = vmatprep.subr.mxu0 0.0
    %417 = vmatpush1.msra.mxu0 0.0
    %418 = vmatprep.subr.mxu0 0.0
    %419 = vmatpush1.msra.mxu0 0.0
    %420 = vmatprep.subr.mxu0 0.0
    %421 = vmatpush1.msra.mxu0 0.0
    %422 = vmatprep.subr.mxu0 0.0
    %423 = vmatpush1.msra.mxu0 0.0
    %424 = vmatprep.subr.mxu0 0.0
    %425 = vmatpush1.msra.mxu0 0.0
    %426 = vmatprep.subr.mxu0 0.0
    %427 = vmatpush1.msra.mxu0 0.0
    %428 = vmatprep.subr.mxu0 0.0
    %429 = vmatpush1.msra.mxu0 0.0
    %430 = vmatprep.subr.mxu0 0.0
    %431 = vmatpush1.msra.mxu0 0.0
    %432 = vmatprep.subr.mxu0 0.0
    %433 = vmatpush1.msra.mxu0 0.0
    %434 = vmatprep.subr.mxu0 0.0
    %435 = vmatpush1.msra.mxu0 0.0
    %436 = vmatprep.subr.mxu0 0.0
    %437 = vmatpush1.msra.mxu0 0.0
    %438 = vmatprep.subr.mxu0 0.0
    %439 = vmatpush1.msra.mxu0 0.0
    %440 = vmatprep.subr.mxu0 0.0
    %441 = vmatpush1.msra.mxu0 0.0
    %442 = vmatprep.subr.mxu0 0.0
    %443 = vmatpush1.msra.mxu0 0.0
    %444 = vmatprep.subr.mxu0 0.0
    %445 = vmatpush1.msra.mxu0 0.0
    %446 = vmatprep.subr.mxu0 0.0
    %447 = vmatpush1.msra.mxu0 0.0
    %448 = vmatprep.subr.mxu0 0.0
    %449 = vmatpush1.msra.mxu0 0.0
    %450 = vmatprep.subr.mxu0 0.0
    %451 = vmatpush1.msra.mxu0 0.0
    %452 = vmatprep.subr.mxu0 0.0
    %453 = vmatpush1.msra.mxu0 0.0
    %454 = vmatprep.subr.mxu0 0.0
    %455 = vmatpush1.msra.mxu0 0.0
    %456 = vmatprep.subr.mxu0 0.0
    %457 = vmatpush1.msra.mxu0 0.0
    %458 = vmatprep.subr.mxu0 0.0
    %459 = vmatpush1.msra.mxu0 0.0
    %460 = vmatprep.subr.mxu0 0.0
    %461 = vmatpush1.msra.mxu0 0.0
    %462 = vmatprep.subr.mxu0 0.0
    %463 = vmatpush1.msra.mxu0 0.0
    %464 = vmatprep.mubr.f32.mxu0 0.0
    %465 = vmatmul.mubr.f32.gmra.mrb[0].mxu0 %v398
    %v466 = vpop.f32.mrb[0].mxu0
    %v467 = vadd.f32 0.0, %v466
    %v468 = vpop.f32.mrb[0].mxu0
    %469 = vdwg.mxu0
    %v470 = vadd.f32 %v391, %v467
    %v471 = vld [vmem:[%s1 + $0x38] sm:$0xff]
    %v472 = vadd.f32 %v470, %v471
    %v473 = vmax.f32 %v472, 0.0
    %v474 = vld [vmem:[%s1 + $0x40] sm:$0xff]
    %v475 = vld [vmem:[%s1 + $0x48] sm:$0xff]
    %v476 = vld [vmem:[%s1 + $0x50] sm:$0xff]
    %v477 = vld [vmem:[%s1 + $0x58] sm:$0xff]
    %v479 = vrot.slane %v473, 1
    %vm480 = vcmask 130048
    %v481 = vsel %vm480, %v479, 0
    %483 = vmatprep.subr.mxu0 0.0
    %484 = vmatpush1.msra.mxu0 %v476
    %485 = vmatprep.subr.mxu0 0.0
    %486 = vmatpush1.msra.mxu0 %v477
    %487 = vmatprep.subr.mxu0 0.0
    %488 = vmatpush1.msra.mxu0 0.0
    %489 = vmatprep.subr.mxu0 0.0
    %490 = vmatpush1.msra.mxu0 0.0
    %491 = vmatprep.subr.mxu0 0.0
    %492 = vmatpush1.msra.mxu0 0.0
    %493 = vmatprep.subr.mxu0 0.0
    %494 = vmatpush1.msra.mxu0 0.0
    %495 = vmatprep.subr.mxu0 0.0
    %496 = vmatpush1.msra.mxu0 0.0
    %497 = vmatprep.subr.mxu0 0.0
    %498 = vmatpush1.msra.mxu0 0.0
    %499 = vmatprep.subr.mxu0 0.0
    %500 = vmatpush1.msra.mxu0 0.0
    %501 = vmatprep.subr.mxu0 0.0
    %502 = vmatpush1.msra.mxu0 0.0
    %503 = vmatprep.subr.mxu0 0.0
    %504 = vmatpush1.msra.mxu0 0.0
    %505 = vmatprep.subr.mxu0 0.0
    %506 = vmatpush1.msra.mxu0 0.0
    %507 = vmatprep.subr.mxu0 0.0
    %508 = vmatpush1.msra.mxu0 0.0
    %509 = vmatprep.subr.mxu0 0.0
    %510 = vmatpush1.msra.mxu0 0.0
    %511 = vmatprep.subr.mxu0 0.0
    %512 = vmatpush1.msra.mxu0 0.0
    %513 = vmatprep.subr.mxu0 0.0
    %514 = vmatpush1.msra.mxu0 0.0
    %515 = vmatprep.subr.mxu0 0.0
    %516 = vmatpush1.msra.mxu0 0.0
    %517 = vmatprep.subr.mxu0 0.0
    %518 = vmatpush1.msra.mxu0 0.0
    %519 = vmatprep.subr.mxu0 0.0
    %520 = vmatpush1.msra.mxu0 0.0
    %521 = vmatprep.subr.mxu0 0.0
    %522 = vmatpush1.msra.mxu0 0.0
    %523 = vmatprep.subr.mxu0 0.0
    %524 = vmatpush1.msra.mxu0 0.0
    %525 = vmatprep.subr.mxu0 0.0
    %526 = vmatpush1.msra.mxu0 0.0
    %527 = vmatprep.subr.mxu0 0.0
    %528 = vmatpush1.msra.mxu0 0.0
    %529 = vmatprep.subr.mxu0 0.0
    %530 = vmatpush1.msra.mxu0 0.0
    %531 = vmatprep.subr.mxu0 0.0
    %532 = vmatpush1.msra.mxu0 0.0
    %533 = vmatprep.subr.mxu0 0.0
    %534 = vmatpush1.msra.mxu0 0.0
    %535 = vmatprep.subr.mxu0 0.0
    %536 = vmatpush1.msra.mxu0 0.0
    %537 = vmatprep.subr.mxu0 0.0
    %538 = vmatpush1.msra.mxu0 0.0
    %539 = vmatprep.subr.mxu0 0.0
    %540 = vmatpush1.msra.mxu0 0.0
    %541 = vmatprep.subr.mxu0 0.0
    %542 = vmatpush1.msra.mxu0 0.0
    %543 = vmatprep.subr.mxu0 0.0
    %544 = vmatpush1.msra.mxu0 0.0
    %545 = vmatprep.subr.mxu0 0.0
    %546 = vmatpush1.msra.mxu0 0.0
    %547 = vmatprep.mubr.f32.mxu0 0.0
    %548 = vmatmul.mubr.f32.gmra.mrb[0].mxu0 %v481
    %v549 = vpop.f32.mrb[0].mxu0
    %v550 = vadd.f32 0.0, %v549
    %v551 = vpop.f32.mrb[0].mxu0
    %552 = vdwg.mxu0
    %v553 = vsel %vm480, %v473, 0
    %555 = vmatprep.subr.mxu0 0.0
    %556 = vmatpush1.msra.mxu0 %v474
    %557 = vmatprep.subr.mxu0 0.0
    %558 = vmatpush1.msra.mxu0 %v475
    %559 = vmatprep.subr.mxu0 0.0
    %560 = vmatpush1.msra.mxu0 0.0
    %561 = vmatprep.subr.mxu0 0.0
    %562 = vmatpush1.msra.mxu0 0.0
    %563 = vmatprep.subr.mxu0 0.0
    %564 = vmatpush1.msra.mxu0 0.0
    %565 = vmatprep.subr.mxu0 0.0
    %566 = vmatpush1.msra.mxu0 0.0
    %567 = vmatprep.subr.mxu0 0.0
    %568 = vmatpush1.msra.mxu0 0.0
    %569 = vmatprep.subr.mxu0 0.0
    %570 = vmatpush1.msra.mxu0 0.0
    %571 = vmatprep.subr.mxu0 0.0
    %572 = vmatpush1.msra.mxu0 0.0
    %573 = vmatprep.subr.mxu0 0.0
    %574 = vmatpush1.msra.mxu0 0.0
    %575 = vmatprep.subr.mxu0 0.0
    %576 = vmatpush1.msra.mxu0 0.0
    %577 = vmatprep.subr.mxu0 0.0
    %578 = vmatpush1.msra.mxu0 0.0
    %579 = vmatprep.subr.mxu0 0.0
    %580 = vmatpush1.msra.mxu0 0.0
    %581 = vmatprep.subr.mxu0 0.0
    %582 = vmatpush1.msra.mxu0 0.0
    %583 = vmatprep.subr.mxu0 0.0
    %584 = vmatpush1.msra.mxu0 0.0
    %585 = vmatprep.subr.mxu0 0.0
    %586 = vmatpush1.msra.mxu0 0.0
    %587 = vmatprep.subr.mxu0 0.0
    %588 = vmatpush1.msra.mxu0 0.0
    %589 = vmatprep.subr.mxu0 0.0
    %590 = vmatpush1.msra.mxu0 0.0
    %591 = vmatprep.subr.mxu0 0.0
    %592 = vmatpush1.msra.mxu0 0.0
    %593 = vmatprep.subr.mxu0 0.0
    %594 = vmatpush1.msra.mxu0 0.0
    %595 = vmatprep.subr.mxu0 0.0
    %596 = vmatpush1.msra.mxu0 0.0
    %597 = vmatprep.subr.mxu0 0.0
    %598 = vmatpush1.msra.mxu0 0.0
    %599 = vmatprep.subr.mxu0 0.0
    %600 = vmatpush1.msra.mxu0 0.0
    %601 = vmatprep.subr.mxu0 0.0
    %602 = vmatpush1.msra.mxu0 0.0
    %603 = vmatprep.subr.mxu0 0.0
    %604 = vmatpush1.msra.mxu0 0.0
    %605 = vmatprep.subr.mxu0 0.0
    %606 = vmatpush1.msra.mxu0 0.0
    %607 = vmatprep.subr.mxu0 0.0
    %608 = vmatpush1.msra.mxu0 0.0
    %609 = vmatprep.subr.mxu0 0.0
    %610 = vmatpush1.msra.mxu0 0.0
    %611 = vmatprep.subr.mxu0 0.0
    %612 = vmatpush1.msra.mxu0 0.0
    %613 = vmatprep.subr.mxu0 0.0
    %614 = vmatpush1.msra.mxu0 0.0
    %615 = vmatprep.subr.mxu0 0.0
    %616 = vmatpush1.msra.mxu0 0.0
    %617 = vmatprep.subr.mxu0 0.0
    %618 = vmatpush1.msra.mxu0 0.0
    %619 = vmatprep.mubr.f32.mxu0 0.0
    %620 = vmatmul.mubr.f32.gmra.mrb[0].mxu0 %v553
    %v621 = vpop.f32.mrb[0].mxu0
    %v622 = vadd.f32 %v550, %v621
    %v623 = vpop.f32.mrb[0].mxu0
    %624 = vdwg.mxu0
    %v625 = vld [vmem:[%s1 + $0x60] sm:$0xff]
    %v626 = vld [vmem:[%s1 + $0x68] sm:$0xff]
    %v627 = vrot.slane %v473, 2
    %v628 = vsel %vm480, %v627, 0
    %630 = vmatprep.subr.mxu0 0.0
    %631 = vmatpush1.msra.mxu0 %v625
    %632 = vmatprep.subr.mxu0 0.0
    %633 = vmatpush1.msra.mxu0 %v626
    %634 = vmatprep.subr.mxu0 0.0
    %635 = vmatpush1.msra.mxu0 0.0
    %636 = vmatprep.subr.mxu0 0.0
    %637 = vmatpush1.msra.mxu0 0.0
    %638 = vmatprep.subr.mxu0 0.0
    %639 = vmatpush1.msra.mxu0 0.0
    %640 = vmatprep.subr.mxu0 0.0
    %641 = vmatpush1.msra.mxu0 0.0
    %642 = vmatprep.subr.mxu0 0.0
    %643 = vmatpush1.msra.mxu0 0.0
    %644 = vmatprep.subr.mxu0 0.0
    %645 = vmatpush1.msra.mxu0 0.0
    %646 = vmatprep.subr.mxu0 0.0
    %647 = vmatpush1.msra.mxu0 0.0
    %648 = vmatprep.subr.mxu0 0.0
    %649 = vmatpush1.msra.mxu0 0.0
    %650 = vmatprep.subr.mxu0 0.0
    %651 = vmatpush1.msra.mxu0 0.0
    %652 = vmatprep.subr.mxu0 0.0
    %653 = vmatpush1.msra.mxu0 0.0
    %654 = vmatprep.subr.mxu0 0.0
    %655 = vmatpush1.msra.mxu0 0.0
    %656 = vmatprep.subr.mxu0 0.0
    %657 = vmatpush1.msra.mxu0 0.0
    %658 = vmatprep.subr.mxu0 0.0
    %659 = vmatpush1.msra.mxu0 0.0
    %660 = vmatprep.subr.mxu0 0.0
    %661 = vmatpush1.msra.mxu0 0.0
    %662 = vmatprep.subr.mxu0 0.0
    %663 = vmatpush1.msra.mxu0 0.0
    %664 = vmatprep.subr.mxu0 0.0
    %665 = vmatpush1.msra.mxu0 0.0
    %666 = vmatprep.subr.mxu0 0.0
    %667 = vmatpush1.msra.mxu0 0.0
    %668 = vmatprep.subr.mxu0 0.0
    %669 = vmatpush1.msra.mxu0 0.0
    %670 = vmatprep.subr.mxu0 0.0
    %671 = vmatpush1.msra.mxu0 0.0
    %672 = vmatprep.subr.mxu0 0.0
    %673 = vmatpush1.msra.mxu0 0.0
    %674 = vmatprep.subr.mxu0 0.0
    %675 = vmatpush1.msra.mxu0 0.0
    %676 = vmatprep.subr.mxu0 0.0
    %677 = vmatpush1.msra.mxu0 0.0
    %678 = vmatprep.subr.mxu0 0.0
    %679 = vmatpush1.msra.mxu0 0.0
    %680 = vmatprep.subr.mxu0 0.0
    %681 = vmatpush1.msra.mxu0 0.0
    %682 = vmatprep.subr.mxu0 0.0
    %683 = vmatpush1.msra.mxu0 0.0
    %684 = vmatprep.subr.mxu0 0.0
    %685 = vmatpush1.msra.mxu0 0.0
    %686 = vmatprep.subr.mxu0 0.0
    %687 = vmatpush1.msra.mxu0 0.0
    %688 = vmatprep.subr.mxu0 0.0
    %689 = vmatpush1.msra.mxu0 0.0
    %690 = vmatprep.subr.mxu0 0.0
    %691 = vmatpush1.msra.mxu0 0.0
    %692 = vmatprep.subr.mxu0 0.0
    %693 = vmatpush1.msra.mxu0 0.0
    %694 = vmatprep.mubr.f32.mxu0 0.0
    %695 = vmatmul.mubr.f32.gmra.mrb[0].mxu0 %v628
    %v696 = vpop.f32.mrb[0].mxu0
    %v697 = vadd.f32 0.0, %v696
    %v698 = vpop.f32.mrb[0].mxu0
    %699 = vdwg.mxu0
    %v700 = vadd.f32 %v622, %v697
    %v701 = vld [vmem:[%s1 + $0x70] sm:$0xff]
    %v702 = vld [vmem:[%s1 + $0x78] sm:$0xff]
    %v703 = vrot.slane %v473, 3
    %v704 = vsel %vm480, %v703, 0
    %706 = vmatprep.subr.mxu0 0.0
    %707 = vmatpush1.msra.mxu0 %v701
    %708 = vmatprep.subr.mxu0 0.0
    %709 = vmatpush1.msra.mxu0 %v702
    %710 = vmatprep.subr.mxu0 0.0
    %711 = vmatpush1.msra.mxu0 0.0
    %712 = vmatprep.subr.mxu0 0.0
    %713 = vmatpush1.msra.mxu0 0.0
    %714 = vmatprep.subr.mxu0 0.0
    %715 = vmatpush1.msra.mxu0 0.0
    %716 = vmatprep.subr.mxu0 0.0
    %717 = vmatpush1.msra.mxu0 0.0
    %718 = vmatprep.subr.mxu0 0.0
    %719 = vmatpush1.msra.mxu0 0.0
    %720 = vmatprep.subr.mxu0 0.0
    %721 = vmatpush1.msra.mxu0 0.0
    %722 = vmatprep.subr.mxu0 0.0
    %723 = vmatpush1.msra.mxu0 0.0
    %724 = vmatprep.subr.mxu0 0.0
    %725 = vmatpush1.msra.mxu0 0.0
    %726 = vmatprep.subr.mxu0 0.0
    %727 = vmatpush1.msra.mxu0 0.0
    %728 = vmatprep.subr.mxu0 0.0
    %729 = vmatpush1.msra.mxu0 0.0
    %730 = vmatprep.subr.mxu0 0.0
    %731 = vmatpush1.msra.mxu0 0.0
    %732 = vmatprep.subr.mxu0 0.0
    %733 = vmatpush1.msra.mxu0 0.0
    %734 = vmatprep.subr.mxu0 0.0
    %735 = vmatpush1.msra.mxu0 0.0
    %736 = vmatprep.subr.mxu0 0.0
    %737 = vmatpush1.msra.mxu0 0.0
    %738 = vmatprep.subr.mxu0 0.0
    %739 = vmatpush1.msra.mxu0 0.0
    %740 = vmatprep.subr.mxu0 0.0
    %741 = vmatpush1.msra.mxu0 0.0
    %742 = vmatprep.subr.mxu0 0.0
    %743 = vmatpush1.msra.mxu0 0.0
    %744 = vmatprep.subr.mxu0 0.0
    %745 = vmatpush1.msra.mxu0 0.0
    %746 = vmatprep.subr.mxu0 0.0
    %747 = vmatpush1.msra.mxu0 0.0
    %748 = vmatprep.subr.mxu0 0.0
    %749 = vmatpush1.msra.mxu0 0.0
    %750 = vmatprep.subr.mxu0 0.0
    %751 = vmatpush1.msra.mxu0 0.0
    %752 = vmatprep.subr.mxu0 0.0
    %753 = vmatpush1.msra.mxu0 0.0
    %754 = vmatprep.subr.mxu0 0.0
    %755 = vmatpush1.msra.mxu0 0.0
    %756 = vmatprep.subr.mxu0 0.0
    %757 = vmatpush1.msra.mxu0 0.0
    %758 = vmatprep.subr.mxu0 0.0
    %759 = vmatpush1.msra.mxu0 0.0
    %760 = vmatprep.subr.mxu0 0.0
    %761 = vmatpush1.msra.mxu0 0.0
    %762 = vmatprep.subr.mxu0 0.0
    %763 = vmatpush1.msra.mxu0 0.0
    %764 = vmatprep.subr.mxu0 0.0
    %765 = vmatpush1.msra.mxu0 0.0
    %766 = vmatprep.subr.mxu0 0.0
    %767 = vmatpush1.msra.mxu0 0.0
    %768 = vmatprep.subr.mxu0 0.0
    %769 = vmatpush1.msra.mxu0 0.0
    %770 = vmatprep.mubr.f32.mxu0 0.0
    %771 = vmatmul.mubr.f32.gmra.mrb[0].mxu0 %v704
    %v772 = vpop.f32.mrb[0].mxu0
    %v773 = vadd.f32 0.0, %v772
    %v774 = vpop.f32.mrb[0].mxu0
    %775 = vdwg.mxu0
    %v776 = vadd.f32 %v700, %v773
    %v777 = vld [vmem:[%s1 + $0x80] sm:$0xff]
    %v778 = vld [vmem:[%s1 + $0x88] sm:$0xff]
    %v779 = vrot.slane %v473, 4
    %v780 = vsel %vm480, %v779, 0
    %782 = vmatprep.subr.mxu0 0.0
    %783 = vmatpush1.msra.mxu0 %v777
    %784 = vmatprep.subr.mxu0 0.0
    %785 = vmatpush1.msra.mxu0 %v778
    %786 = vmatprep.subr.mxu0 0.0
    %787 = vmatpush1.msra.mxu0 0.0
    %788 = vmatprep.subr.mxu0 0.0
    %789 = vmatpush1.msra.mxu0 0.0
    %790 = vmatprep.subr.mxu0 0.0
    %791 = vmatpush1.msra.mxu0 0.0
    %792 = vmatprep.subr.mxu0 0.0
    %793 = vmatpush1.msra.mxu0 0.0
    %794 = vmatprep.subr.mxu0 0.0
    %795 = vmatpush1.msra.mxu0 0.0
    %796 = vmatprep.subr.mxu0 0.0
    %797 = vmatpush1.msra.mxu0 0.0
    %798 = vmatprep.subr.mxu0 0.0
    %799 = vmatpush1.msra.mxu0 0.0
    %800 = vmatprep.subr.mxu0 0.0
    %801 = vmatpush1.msra.mxu0 0.0
    %802 = vmatprep.subr.mxu0 0.0
    %803 = vmatpush1.msra.mxu0 0.0
    %804 = vmatprep.subr.mxu0 0.0
    %805 = vmatpush1.msra.mxu0 0.0
    %806 = vmatprep.subr.mxu0 0.0
    %807 = vmatpush1.msra.mxu0 0.0
    %808 = vmatprep.subr.mxu0 0.0
    %809 = vmatpush1.msra.mxu0 0.0
    %810 = vmatprep.subr.mxu0 0.0
    %811 = vmatpush1.msra.mxu0 0.0
    %812 = vmatprep.subr.mxu0 0.0
    %813 = vmatpush1.msra.mxu0 0.0
    %814 = vmatprep.subr.mxu0 0.0
    %815 = vmatpush1.msra.mxu0 0.0
    %816 = vmatprep.subr.mxu0 0.0
    %817 = vmatpush1.msra.mxu0 0.0
    %818 = vmatprep.subr.mxu0 0.0
    %819 = vmatpush1.msra.mxu0 0.0
    %820 = vmatprep.subr.mxu0 0.0
    %821 = vmatpush1.msra.mxu0 0.0
    %822 = vmatprep.subr.mxu0 0.0
    %823 = vmatpush1.msra.mxu0 0.0
    %824 = vmatprep.subr.mxu0 0.0
    %825 = vmatpush1.msra.mxu0 0.0
    %826 = vmatprep.subr.mxu0 0.0
    %827 = vmatpush1.msra.mxu0 0.0
    %828 = vmatprep.subr.mxu0 0.0
    %829 = vmatpush1.msra.mxu0 0.0
    %830 = vmatprep.subr.mxu0 0.0
    %831 = vmatpush1.msra.mxu0 0.0
    %832 = vmatprep.subr.mxu0 0.0
    %833 = vmatpush1.msra.mxu0 0.0
    %834 = vmatprep.subr.mxu0 0.0
    %835 = vmatpush1.msra.mxu0 0.0
    %836 = vmatprep.subr.mxu0 0.0
    %837 = vmatpush1.msra.mxu0 0.0
    %838 = vmatprep.subr.mxu0 0.0
    %839 = vmatpush1.msra.mxu0 0.0
    %840 = vmatprep.subr.mxu0 0.0
    %841 = vmatpush1.msra.mxu0 0.0
    %842 = vmatprep.subr.mxu0 0.0
    %843 = vmatpush1.msra.mxu0 0.0
    %844 = vmatprep.subr.mxu0 0.0
    %845 = vmatpush1.msra.mxu0 0.0
    %846 = vmatprep.mubr.f32.mxu0 0.0
    %847 = vmatmul.mubr.f32.gmra.mrb[0].mxu0 %v780
    %v848 = vpop.f32.mrb[0].mxu0
    %v849 = vadd.f32 0.0, %v848
    %v850 = vpop.f32.mrb[0].mxu0
    %851 = vdwg.mxu0
    %v852 = vadd.f32 %v776, %v849
    %v853 = vld [vmem:[%s1 + $0x90] sm:$0xff]
    %v854 = vld [vmem:[%s1 + $0x98] sm:$0xff]
    %v855 = vrot.slane %v473, 5
    %v856 = vsel %vm480, %v855, 0
    %858 = vmatprep.subr.mxu0 0.0
    %859 = vmatpush1.msra.mxu0 %v853
    %860 = vmatprep.subr.mxu0 0.0
    %861 = vmatpush1.msra.mxu0 %v854
    %862 = vmatprep.subr.mxu0 0.0
    %863 = vmatpush1.msra.mxu0 0.0
    %864 = vmatprep.subr.mxu0 0.0
    %865 = vmatpush1.msra.mxu0 0.0
    %866 = vmatprep.subr.mxu0 0.0
    %867 = vmatpush1.msra.mxu0 0.0
    %868 = vmatprep.subr.mxu0 0.0
    %869 = vmatpush1.msra.mxu0 0.0
    %870 = vmatprep.subr.mxu0 0.0
    %871 = vmatpush1.msra.mxu0 0.0
    %872 = vmatprep.subr.mxu0 0.0
    %873 = vmatpush1.msra.mxu0 0.0
    %874 = vmatprep.subr.mxu0 0.0
    %875 = vmatpush1.msra.mxu0 0.0
    %876 = vmatprep.subr.mxu0 0.0
    %877 = vmatpush1.msra.mxu0 0.0
    %878 = vmatprep.subr.mxu0 0.0
    %879 = vmatpush1.msra.mxu0 0.0
    %880 = vmatprep.subr.mxu0 0.0
    %881 = vmatpush1.msra.mxu0 0.0
    %882 = vmatprep.subr.mxu0 0.0
    %883 = vmatpush1.msra.mxu0 0.0
    %884 = vmatprep.subr.mxu0 0.0
    %885 = vmatpush1.msra.mxu0 0.0
    %886 = vmatprep.subr.mxu0 0.0
    %887 = vmatpush1.msra.mxu0 0.0
    %888 = vmatprep.subr.mxu0 0.0
    %889 = vmatpush1.msra.mxu0 0.0
    %890 = vmatprep.subr.mxu0 0.0
    %891 = vmatpush1.msra.mxu0 0.0
    %892 = vmatprep.subr.mxu0 0.0
    %893 = vmatpush1.msra.mxu0 0.0
    %894 = vmatprep.subr.mxu0 0.0
    %895 = vmatpush1.msra.mxu0 0.0
    %896 = vmatprep.subr.mxu0 0.0
    %897 = vmatpush1.msra.mxu0 0.0
    %898 = vmatprep.subr.mxu0 0.0
    %899 = vmatpush1.msra.mxu0 0.0
    %900 = vmatprep.subr.mxu0 0.0
    %901 = vmatpush1.msra.mxu0 0.0
    %902 = vmatprep.subr.mxu0 0.0
    %903 = vmatpush1.msra.mxu0 0.0
    %904 = vmatprep.subr.mxu0 0.0
    %905 = vmatpush1.msra.mxu0 0.0
    %906 = vmatprep.subr.mxu0 0.0
    %907 = vmatpush1.msra.mxu0 0.0
    %908 = vmatprep.subr.mxu0 0.0
    %909 = vmatpush1.msra.mxu0 0.0
    %910 = vmatprep.subr.mxu0 0.0
    %911 = vmatpush1.msra.mxu0 0.0
    %912 = vmatprep.subr.mxu0 0.0
    %913 = vmatpush1.msra.mxu0 0.0
    %914 = vmatprep.subr.mxu0 0.0
    %915 = vmatpush1.msra.mxu0 0.0
    %916 = vmatprep.subr.mxu0 0.0
    %917 = vmatpush1.msra.mxu0 0.0
    %918 = vmatprep.subr.mxu0 0.0
    %919 = vmatpush1.msra.mxu0 0.0
    %920 = vmatprep.subr.mxu0 0.0
    %921 = vmatpush1.msra.mxu0 0.0
    %922 = vmatprep.mubr.f32.mxu0 0.0
    %923 = vmatmul.mubr.f32.gmra.mrb[0].mxu0 %v856
    %v924 = vpop.f32.mrb[0].mxu0
    %v925 = vadd.f32 0.0, %v924
    %v926 = vpop.f32.mrb[0].mxu0
    %927 = vdwg.mxu0
    %v928 = vadd.f32 %v852, %v925
    %v929 = vld [vmem:[%s1 + $0xa0] sm:$0xff]
    %v930 = vld [vmem:[%s1 + $0xa8] sm:$0xff]
    %v931 = vrot.slane %v473, 6
    %v932 = vsel %vm480, %v931, 0
    %934 = vmatprep.subr.mxu0 0.0
    %935 = vmatpush1.msra.mxu0 %v929
    %936 = vmatprep.subr.mxu0 0.0
    %937 = vmatpush1.msra.mxu0 %v930
    %938 = vmatprep.subr.mxu0 0.0
    %939 = vmatpush1.msra.mxu0 0.0
    %940 = vmatprep.subr.mxu0 0.0
    %941 = vmatpush1.msra.mxu0 0.0
    %942 = vmatprep.subr.mxu0 0.0
    %943 = vmatpush1.msra.mxu0 0.0
    %944 = vmatprep.subr.mxu0 0.0
    %945 = vmatpush1.msra.mxu0 0.0
    %946 = vmatprep.subr.mxu0 0.0
    %947 = vmatpush1.msra.mxu0 0.0
    %948 = vmatprep.subr.mxu0 0.0
    %949 = vmatpush1.msra.mxu0 0.0
    %950 = vmatprep.subr.mxu0 0.0
    %951 = vmatpush1.msra.mxu0 0.0
    %952 = vmatprep.subr.mxu0 0.0
    %953 = vmatpush1.msra.mxu0 0.0
    %954 = vmatprep.subr.mxu0 0.0
    %955 = vmatpush1.msra.mxu0 0.0
    %956 = vmatprep.subr.mxu0 0.0
    %957 = vmatpush1.msra.mxu0 0.0
    %958 = vmatprep.subr.mxu0 0.0
    %959 = vmatpush1.msra.mxu0 0.0
    %960 = vmatprep.subr.mxu0 0.0
    %961 = vmatpush1.msra.mxu0 0.0
    %962 = vmatprep.subr.mxu0 0.0
    %963 = vmatpush1.msra.mxu0 0.0
    %964 = vmatprep.subr.mxu0 0.0
    %965 = vmatpush1.msra.mxu0 0.0
    %966 = vmatprep.subr.mxu0 0.0
    %967 = vmatpush1.msra.mxu0 0.0
    %968 = vmatprep.subr.mxu0 0.0
    %969 = vmatpush1.msra.mxu0 0.0
    %970 = vmatprep.subr.mxu0 0.0
    %971 = vmatpush1.msra.mxu0 0.0
    %972 = vmatprep.subr.mxu0 0.0
    %973 = vmatpush1.msra.mxu0 0.0
    %974 = vmatprep.subr.mxu0 0.0
    %975 = vmatpush1.msra.mxu0 0.0
    %976 = vmatprep.subr.mxu0 0.0
    %977 = vmatpush1.msra.mxu0 0.0
    %978 = vmatprep.subr.mxu0 0.0
    %979 = vmatpush1.msra.mxu0 0.0
    %980 = vmatprep.subr.mxu0 0.0
    %981 = vmatpush1.msra.mxu0 0.0
    %982 = vmatprep.subr.mxu0 0.0
    %983 = vmatpush1.msra.mxu0 0.0
    %984 = vmatprep.subr.mxu0 0.0
    %985 = vmatpush1.msra.mxu0 0.0
    %986 = vmatprep.subr.mxu0 0.0
    %987 = vmatpush1.msra.mxu0 0.0
    %988 = vmatprep.subr.mxu0 0.0
    %989 = vmatpush1.msra.mxu0 0.0
    %990 = vmatprep.subr.mxu0 0.0
    %991 = vmatpush1.msra.mxu0 0.0
    %992 = vmatprep.subr.mxu0 0.0
    %993 = vmatpush1.msra.mxu0 0.0
    %994 = vmatprep.subr.mxu0 0.0
    %995 = vmatpush1.msra.mxu0 0.0
    %996 = vmatprep.subr.mxu0 0.0
    %997 = vmatpush1.msra.mxu0 0.0
    %998 = vmatprep.mubr.f32.mxu0 0.0
    %999 = vmatmul.mubr.f32.gmra.mrb[0].mxu0 %v932
    %v1000 = vpop.f32.mrb[0].mxu0
    %v1001 = vadd.f32 0.0, %v1000
    %v1002 = vpop.f32.mrb[0].mxu0
    %1003 = vdwg.mxu0
    %v1004 = vadd.f32 %v928, %v1001
    %v1005 = vld [vmem:[%s1 + $0xb0] sm:$0xff]
    %v1006 = vld [vmem:[%s1 + $0xb8] sm:$0xff]
    %v1007 = vrot.slane %v473, 7
    %v1008 = vsel %vm480, %v1007, 0
    %1010 = vmatprep.subr.mxu0 0.0
    %1011 = vmatpush1.msra.mxu0 %v1005
    %1012 = vmatprep.subr.mxu0 0.0
    %1013 = vmatpush1.msra.mxu0 %v1006
    %1014 = vmatprep.subr.mxu0 0.0
    %1015 = vmatpush1.msra.mxu0 0.0
    %1016 = vmatprep.subr.mxu0 0.0
    %1017 = vmatpush1.msra.mxu0 0.0
    %1018 = vmatprep.subr.mxu0 0.0
    %1019 = vmatpush1.msra.mxu0 0.0
    %1020 = vmatprep.subr.mxu0 0.0
    %1021 = vmatpush1.msra.mxu0 0.0
    %1022 = vmatprep.subr.mxu0 0.0
    %1023 = vmatpush1.msra.mxu0 0.0
    %1024 = vmatprep.subr.mxu0 0.0
    %1025 = vmatpush1.msra.mxu0 0.0
    %1026 = vmatprep.subr.mxu0 0.0
    %1027 = vmatpush1.msra.mxu0 0.0
    %1028 = vmatprep.subr.mxu0 0.0
    %1029 = vmatpush1.msra.mxu0 0.0
    %1030 = vmatprep.subr.mxu0 0.0
    %1031 = vmatpush1.msra.mxu0 0.0
    %1032 = vmatprep.subr.mxu0 0.0
    %1033 = vmatpush1.msra.mxu0 0.0
    %1034 = vmatprep.subr.mxu0 0.0
    %1035 = vmatpush1.msra.mxu0 0.0
    %1036 = vmatprep.subr.mxu0 0.0
    %1037 = vmatpush1.msra.mxu0 0.0
    %1038 = vmatprep.subr.mxu0 0.0
    %1039 = vmatpush1.msra.mxu0 0.0
    %1040 = vmatprep.subr.mxu0 0.0
    %1041 = vmatpush1.msra.mxu0 0.0
    %1042 = vmatprep.subr.mxu0 0.0
    %1043 = vmatpush1.msra.mxu0 0.0
    %1044 = vmatprep.subr.mxu0 0.0
    %1045 = vmatpush1.msra.mxu0 0.0
    %1046 = vmatprep.subr.mxu0 0.0
    %1047 = vmatpush1.msra.mxu0 0.0
    %1048 = vmatprep.subr.mxu0 0.0
    %1049 = vmatpush1.msra.mxu0 0.0
    %1050 = vmatprep.subr.mxu0 0.0
    %1051 = vmatpush1.msra.mxu0 0.0
    %1052 = vmatprep.subr.mxu0 0.0
    %1053 = vmatpush1.msra.mxu0 0.0
    %1054 = vmatprep.subr.mxu0 0.0
    %1055 = vmatpush1.msra.mxu0 0.0
    %1056 = vmatprep.subr.mxu0 0.0
    %1057 = vmatpush1.msra.mxu0 0.0
    %1058 = vmatprep.subr.mxu0 0.0
    %1059 = vmatpush1.msra.mxu0 0.0
    %1060 = vmatprep.subr.mxu0 0.0
    %1061 = vmatpush1.msra.mxu0 0.0
    %1062 = vmatprep.subr.mxu0 0.0
    %1063 = vmatpush1.msra.mxu0 0.0
    %1064 = vmatprep.subr.mxu0 0.0
    %1065 = vmatpush1.msra.mxu0 0.0
    %1066 = vmatprep.subr.mxu0 0.0
    %1067 = vmatpush1.msra.mxu0 0.0
    %1068 = vmatprep.subr.mxu0 0.0
    %1069 = vmatpush1.msra.mxu0 0.0
    %1070 = vmatprep.subr.mxu0 0.0
    %1071 = vmatpush1.msra.mxu0 0.0
    %1072 = vmatprep.subr.mxu0 0.0
    %1073 = vmatpush1.msra.mxu0 0.0
    %1074 = vmatprep.mubr.f32.mxu0 0.0
    %1075 = vmatmul.mubr.f32.gmra.mrb[0].mxu0 %v1008
    %v1076 = vpop.f32.mrb[0].mxu0
    %v1077 = vadd.f32 0.0, %v1076
    %v1078 = vpop.f32.mrb[0].mxu0
    %1079 = vdwg.mxu0
    %v1080 = vadd.f32 %v1004, %v1077
    %1081 = vrot.lane.b32.xlu0 %v479, 112
    %v1082 = vpop.permute.xlu0 %1081
    %v1083 = vsel %vm480, %v1082, 0
    %1085 = vmatprep.subr.mxu0 0.0
    %1086 = vmatpush1.msra.mxu0 %v476
    %1087 = vmatprep.subr.mxu0 0.0
    %1088 = vmatpush1.msra.mxu0 %v477
    %1089 = vmatprep.subr.mxu0 0.0
    %1090 = vmatpush1.msra.mxu0 0.0
    %1091 = vmatprep.subr.mxu0 0.0
    %1092 = vmatpush1.msra.mxu0 0.0
    %1093 = vmatprep.subr.mxu0 0.0
    %1094 = vmatpush1.msra.mxu0 0.0
    %1095 = vmatprep.subr.mxu0 0.0
    %1096 = vmatpush1.msra.mxu0 0.0
    %1097 = vmatprep.subr.mxu0 0.0
    %1098 = vmatpush1.msra.mxu0 0.0
    %1099 = vmatprep.subr.mxu0 0.0
    %1100 = vmatpush1.msra.mxu0 0.0
    %1101 = vmatprep.subr.mxu0 0.0
    %1102 = vmatpush1.msra.mxu0 0.0
    %1103 = vmatprep.subr.mxu0 0.0
    %1104 = vmatpush1.msra.mxu0 0.0
    %1105 = vmatprep.subr.mxu0 0.0
    %1106 = vmatpush1.msra.mxu0 0.0
    %1107 = vmatprep.subr.mxu0 0.0
    %1108 = vmatpush1.msra.mxu0 0.0
    %1109 = vmatprep.subr.mxu0 0.0
    %1110 = vmatpush1.msra.mxu0 0.0
    %1111 = vmatprep.subr.mxu0 0.0
    %1112 = vmatpush1.msra.mxu0 0.0
    %1113 = vmatprep.subr.mxu0 0.0
    %1114 = vmatpush1.msra.mxu0 0.0
    %1115 = vmatprep.subr.mxu0 0.0
    %1116 = vmatpush1.msra.mxu0 0.0
    %1117 = vmatprep.subr.mxu0 0.0
    %1118 = vmatpush1.msra.mxu0 0.0
    %1119 = vmatprep.subr.mxu0 0.0
    %1120 = vmatpush1.msra.mxu0 0.0
    %1121 = vmatprep.subr.mxu0 0.0
    %1122 = vmatpush1.msra.mxu0 0.0
    %1123 = vmatprep.subr.mxu0 0.0
    %1124 = vmatpush1.msra.mxu0 0.0
    %1125 = vmatprep.subr.mxu0 0.0
    %1126 = vmatpush1.msra.mxu0 0.0
    %1127 = vmatprep.subr.mxu0 0.0
    %1128 = vmatpush1.msra.mxu0 0.0
    %1129 = vmatprep.subr.mxu0 0.0
    %1130 = vmatpush1.msra.mxu0 0.0
    %1131 = vmatprep.subr.mxu0 0.0
    %1132 = vmatpush1.msra.mxu0 0.0
    %1133 = vmatprep.subr.mxu0 0.0
    %1134 = vmatpush1.msra.mxu0 0.0
    %1135 = vmatprep.subr.mxu0 0.0
    %1136 = vmatpush1.msra.mxu0 0.0
    %1137 = vmatprep.subr.mxu0 0.0
    %1138 = vmatpush1.msra.mxu0 0.0
    %1139 = vmatprep.subr.mxu0 0.0
    %1140 = vmatpush1.msra.mxu0 0.0
    %1141 = vmatprep.subr.mxu0 0.0
    %1142 = vmatpush1.msra.mxu0 0.0
    %1143 = vmatprep.subr.mxu0 0.0
    %1144 = vmatpush1.msra.mxu0 0.0
    %1145 = vmatprep.subr.mxu0 0.0
    %1146 = vmatpush1.msra.mxu0 0.0
    %1147 = vmatprep.subr.mxu0 0.0
    %1148 = vmatpush1.msra.mxu0 0.0
    %1149 = vmatprep.mubr.f32.mxu0 0.0
    %1150 = vmatmul.mubr.f32.gmra.mrb[0].mxu0 %v1083
    %v1151 = vpop.f32.mrb[0].mxu0
    %v1152 = vadd.f32 0.0, %v1151
    %v1153 = vpop.f32.mrb[0].mxu0
    %1154 = vdwg.mxu0
    %1155 = vrot.lane.b32.xlu0 %v473, 112
    %v1156 = vpop.permute.xlu0 %1155
    %v1157 = vsel %vm480, %v1156, 0
    %1159 = vmatprep.subr.mxu0 0.0
    %1160 = vmatpush1.msra.mxu0 %v474
    %1161 = vmatprep.subr.mxu0 0.0
    %1162 = vmatpush1.msra.mxu0 %v475
    %1163 = vmatprep.subr.mxu0 0.0
    %1164 = vmatpush1.msra.mxu0 0.0
    %1165 = vmatprep.subr.mxu0 0.0
    %1166 = vmatpush1.msra.mxu0 0.0
    %1167 = vmatprep.subr.mxu0 0.0
    %1168 = vmatpush1.msra.mxu0 0.0
    %1169 = vmatprep.subr.mxu0 0.0
    %1170 = vmatpush1.msra.mxu0 0.0
    %1171 = vmatprep.subr.mxu0 0.0
    %1172 = vmatpush1.msra.mxu0 0.0
    %1173 = vmatprep.subr.mxu0 0.0
    %1174 = vmatpush1.msra.mxu0 0.0
    %1175 = vmatprep.subr.mxu0 0.0
    %1176 = vmatpush1.msra.mxu0 0.0
    %1177 = vmatprep.subr.mxu0 0.0
    %1178 = vmatpush1.msra.mxu0 0.0
    %1179 = vmatprep.subr.mxu0 0.0
    %1180 = vmatpush1.msra.mxu0 0.0
    %1181 = vmatprep.subr.mxu0 0.0
    %1182 = vmatpush1.msra.mxu0 0.0
    %1183 = vmatprep.subr.mxu0 0.0
    %1184 = vmatpush1.msra.mxu0 0.0
    %1185 = vmatprep.subr.mxu0 0.0
    %1186 = vmatpush1.msra.mxu0 0.0
    %1187 = vmatprep.subr.mxu0 0.0
    %1188 = vmatpush1.msra.mxu0 0.0
    %1189 = vmatprep.subr.mxu0 0.0
    %1190 = vmatpush1.msra.mxu0 0.0
    %1191 = vmatprep.subr.mxu0 0.0
    %1192 = vmatpush1.msra.mxu0 0.0
    %1193 = vmatprep.subr.mxu0 0.0
    %1194 = vmatpush1.msra.mxu0 0.0
    %1195 = vmatprep.subr.mxu0 0.0
    %1196 = vmatpush1.msra.mxu0 0.0
    %1197 = vmatprep.subr.mxu0 0.0
    %1198 = vmatpush1.msra.mxu0 0.0
    %1199 = vmatprep.subr.mxu0 0.0
    %1200 = vmatpush1.msra.mxu0 0.0
    %1201 = vmatprep.subr.mxu0 0.0
    %1202 = vmatpush1.msra.mxu0 0.0
    %1203 = vmatprep.subr.mxu0 0.0
    %1204 = vmatpush1.msra.mxu0 0.0
    %1205 = vmatprep.subr.mxu0 0.0
    %1206 = vmatpush1.msra.mxu0 0.0
    %1207 = vmatprep.subr.mxu0 0.0
    %1208 = vmatpush1.msra.mxu0 0.0
    %1209 = vmatprep.subr.mxu0 0.0
    %1210 = vmatpush1.msra.mxu0 0.0
    %1211 = vmatprep.subr.mxu0 0.0
    %1212 = vmatpush1.msra.mxu0 0.0
    %1213 = vmatprep.subr.mxu0 0.0
    %1214 = vmatpush1.msra.mxu0 0.0
    %1215 = vmatprep.subr.mxu0 0.0
    %1216 = vmatpush1.msra.mxu0 0.0
    %1217 = vmatprep.subr.mxu0 0.0
    %1218 = vmatpush1.msra.mxu0 0.0
    %1219 = vmatprep.subr.mxu0 0.0
    %1220 = vmatpush1.msra.mxu0 0.0
    %1221 = vmatprep.subr.mxu0 0.0
    %1222 = vmatpush1.msra.mxu0 0.0
    %1223 = vmatprep.mubr.f32.mxu0 0.0
    %1224 = vmatmul.mubr.f32.gmra.mrb[0].mxu0 %v1157
    %v1225 = vpop.f32.mrb[0].mxu0
    %v1226 = vadd.f32 %v1152, %v1225
    %v1227 = vpop.f32.mrb[0].mxu0
    %1228 = vdwg.mxu0
    %1229 = vrot.lane.b32.xlu0 %v627, 112
    %v1230 = vpop.permute.xlu0 %1229
    %v1231 = vsel %vm480, %v1230, 0
    %1233 = vmatprep.subr.mxu0 0.0
    %1234 = vmatpush1.msra.mxu0 %v625
    %1235 = vmatprep.subr.mxu0 0.0
    %1236 = vmatpush1.msra.mxu0 %v626
    %1237 = vmatprep.subr.mxu0 0.0
    %1238 = vmatpush1.msra.mxu0 0.0
    %1239 = vmatprep.subr.mxu0 0.0
    %1240 = vmatpush1.msra.mxu0 0.0
    %1241 = vmatprep.subr.mxu0 0.0
    %1242 = vmatpush1.msra.mxu0 0.0
    %1243 = vmatprep.subr.mxu0 0.0
    %1244 = vmatpush1.msra.mxu0 0.0
    %1245 = vmatprep.subr.mxu0 0.0
    %1246 = vmatpush1.msra.mxu0 0.0
    %1247 = vmatprep.subr.mxu0 0.0
    %1248 = vmatpush1.msra.mxu0 0.0
    %1249 = vmatprep.subr.mxu0 0.0
    %1250 = vmatpush1.msra.mxu0 0.0
    %1251 = vmatprep.subr.mxu0 0.0
    %1252 = vmatpush1.msra.mxu0 0.0
    %1253 = vmatprep.subr.mxu0 0.0
    %1254 = vmatpush1.msra.mxu0 0.0
    %1255 = vmatprep.subr.mxu0 0.0
    %1256 = vmatpush1.msra.mxu0 0.0
    %1257 = vmatprep.subr.mxu0 0.0
    %1258 = vmatpush1.msra.mxu0 0.0
    %1259 = vmatprep.subr.mxu0 0.0
    %1260 = vmatpush1.msra.mxu0 0.0
    %1261 = vmatprep.subr.mxu0 0.0
    %1262 = vmatpush1.msra.mxu0 0.0
    %1263 = vmatprep.subr.mxu0 0.0
    %1264 = vmatpush1.msra.mxu0 0.0
    %1265 = vmatprep.subr.mxu0 0.0
    %1266 = vmatpush1.msra.mxu0 0.0
    %1267 = vmatprep.subr.mxu0 0.0
    %1268 = vmatpush1.msra.mxu0 0.0
    %1269 = vmatprep.subr.mxu0 0.0
    %1270 = vmatpush1.msra.mxu0 0.0
    %1271 = vmatprep.subr.mxu0 0.0
    %1272 = vmatpush1.msra.mxu0 0.0
    %1273 = vmatprep.subr.mxu0 0.0
    %1274 = vmatpush1.msra.mxu0 0.0
    %1275 = vmatprep.subr.mxu0 0.0
    %1276 = vmatpush1.msra.mxu0 0.0
    %1277 = vmatprep.subr.mxu0 0.0
    %1278 = vmatpush1.msra.mxu0 0.0
    %1279 = vmatprep.subr.mxu0 0.0
    %1280 = vmatpush1.msra.mxu0 0.0
    %1281 = vmatprep.subr.mxu0 0.0
    %1282 = vmatpush1.msra.mxu0 0.0
    %1283 = vmatprep.subr.mxu0 0.0
    %1284 = vmatpush1.msra.mxu0 0.0
    %1285 = vmatprep.subr.mxu0 0.0
    %1286 = vmatpush1.msra.mxu0 0.0
    %1287 = vmatprep.subr.mxu0 0.0
    %1288 = vmatpush1.msra.mxu0 0.0
    %1289 = vmatprep.subr.mxu0 0.0
    %1290 = vmatpush1.msra.mxu0 0.0
    %1291 = vmatprep.subr.mxu0 0.0
    %1292 = vmatpush1.msra.mxu0 0.0
    %1293 = vmatprep.subr.mxu0 0.0
    %1294 = vmatpush1.msra.mxu0 0.0
    %1295 = vmatprep.subr.mxu0 0.0
    %1296 = vmatpush1.msra.mxu0 0.0
    %1297 = vmatprep.mubr.f32.mxu0 0.0
    %1298 = vmatmul.mubr.f32.gmra.mrb[0].mxu0 %v1231
    %v1299 = vpop.f32.mrb[0].mxu0
    %v1300 = vadd.f32 0.0, %v1299
    %v1301 = vpop.f32.mrb[0].mxu0
    %1302 = vdwg.mxu0
    %v1303 = vadd.f32 %v1226, %v1300
    %1304 = vrot.lane.b32.xlu0 %v703, 112
    %v1305 = vpop.permute.xlu0 %1304
    %v1306 = vsel %vm480, %v1305, 0
    %1308 = vmatprep.subr.mxu0 0.0
    %1309 = vmatpush1.msra.mxu0 %v701
    %1310 = vmatprep.subr.mxu0 0.0
    %1311 = vmatpush1.msra.mxu0 %v702
    %1312 = vmatprep.subr.mxu0 0.0
    %1313 = vmatpush1.msra.mxu0 0.0
    %1314 = vmatprep.subr.mxu0 0.0
    %1315 = vmatpush1.msra.mxu0 0.0
    %1316 = vmatprep.subr.mxu0 0.0
    %1317 = vmatpush1.msra.mxu0 0.0
    %1318 = vmatprep.subr.mxu0 0.0
    %1319 = vmatpush1.msra.mxu0 0.0
    %1320 = vmatprep.subr.mxu0 0.0
    %1321 = vmatpush1.msra.mxu0 0.0
    %1322 = vmatprep.subr.mxu0 0.0
    %1323 = vmatpush1.msra.mxu0 0.0
    %1324 = vmatprep.subr.mxu0 0.0
    %1325 = vmatpush1.msra.mxu0 0.0
    %1326 = vmatprep.subr.mxu0 0.0
    %1327 = vmatpush1.msra.mxu0 0.0
    %1328 = vmatprep.subr.mxu0 0.0
    %1329 = vmatpush1.msra.mxu0 0.0
    %1330 = vmatprep.subr.mxu0 0.0
    %1331 = vmatpush1.msra.mxu0 0.0
    %1332 = vmatprep.subr.mxu0 0.0
    %1333 = vmatpush1.msra.mxu0 0.0
    %1334 = vmatprep.subr.mxu0 0.0
    %1335 = vmatpush1.msra.mxu0 0.0
    %1336 = vmatprep.subr.mxu0 0.0
    %1337 = vmatpush1.msra.mxu0 0.0
    %1338 = vmatprep.subr.mxu0 0.0
    %1339 = vmatpush1.msra.mxu0 0.0
    %1340 = vmatprep.subr.mxu0 0.0
    %1341 = vmatpush1.msra.mxu0 0.0
    %1342 = vmatprep.subr.mxu0 0.0
    %1343 = vmatpush1.msra.mxu0 0.0
    %1344 = vmatprep.subr.mxu0 0.0
    %1345 = vmatpush1.msra.mxu0 0.0
    %1346 = vmatprep.subr.mxu0 0.0
    %1347 = vmatpush1.msra.mxu0 0.0
    %1348 = vmatprep.subr.mxu0 0.0
    %1349 = vmatpush1.msra.mxu0 0.0
    %1350 = vmatprep.subr.mxu0 0.0
    %1351 = vmatpush1.msra.mxu0 0.0
    %1352 = vmatprep.subr.mxu0 0.0
    %1353 = vmatpush1.msra.mxu0 0.0
    %1354 = vmatprep.subr.mxu0 0.0
    %1355 = vmatpush1.msra.mxu0 0.0
    %1356 = vmatprep.subr.mxu0 0.0
    %1357 = vmatpush1.msra.mxu0 0.0
    %1358 = vmatprep.subr.mxu0 0.0
    %1359 = vmatpush1.msra.mxu0 0.0
    %1360 = vmatprep.subr.mxu0 0.0
    %1361 = vmatpush1.msra.mxu0 0.0
    %1362 = vmatprep.subr.mxu0 0.0
    %1363 = vmatpush1.msra.mxu0 0.0
    %1364 = vmatprep.subr.mxu0 0.0
    %1365 = vmatpush1.msra.mxu0 0.0
    %1366 = vmatprep.subr.mxu0 0.0
    %1367 = vmatpush1.msra.mxu0 0.0
    %1368 = vmatprep.subr.mxu0 0.0
    %1369 = vmatpush1.msra.mxu0 0.0
    %1370 = vmatprep.subr.mxu0 0.0
    %1371 = vmatpush1.msra.mxu0 0.0
    %1372 = vmatprep.mubr.f32.mxu0 0.0
    %1373 = vmatmul.mubr.f32.gmra.mrb[0].mxu0 %v1306
    %v1374 = vpop.f32.mrb[0].mxu0
    %v1375 = vadd.f32 0.0, %v1374
    %v1376 = vpop.f32.mrb[0].mxu0
    %1377 = vdwg.mxu0
    %v1378 = vadd.f32 %v1303, %v1375
    %1379 = vrot.lane.b32.xlu0 %v779, 112
    %v1380 = vpop.permute.xlu0 %1379
    %v1381 = vsel %vm480, %v1380, 0
    %1383 = vmatprep.subr.mxu0 0.0
    %1384 = vmatpush1.msra.mxu0 %v777
    %1385 = vmatprep.subr.mxu0 0.0
    %1386 = vmatpush1.msra.mxu0 %v778
    %1387 = vmatprep.subr.mxu0 0.0
    %1388 = vmatpush1.msra.mxu0 0.0
    %1389 = vmatprep.subr.mxu0 0.0
    %1390 = vmatpush1.msra.mxu0 0.0
    %1391 = vmatprep.subr.mxu0 0.0
    %1392 = vmatpush1.msra.mxu0 0.0
    %1393 = vmatprep.subr.mxu0 0.0
    %1394 = vmatpush1.msra.mxu0 0.0
    %1395 = vmatprep.subr.mxu0 0.0
    %1396 = vmatpush1.msra.mxu0 0.0
    %1397 = vmatprep.subr.mxu0 0.0
    %1398 = vmatpush1.msra.mxu0 0.0
    %1399 = vmatprep.subr.mxu0 0.0
    %1400 = vmatpush1.msra.mxu0 0.0
    %1401 = vmatprep.subr.mxu0 0.0
    %1402 = vmatpush1.msra.mxu0 0.0
    %1403 = vmatprep.subr.mxu0 0.0
    %1404 = vmatpush1.msra.mxu0 0.0
    %1405 = vmatprep.subr.mxu0 0.0
    %1406 = vmatpush1.msra.mxu0 0.0
    %1407 = vmatprep.subr.mxu0 0.0
    %1408 = vmatpush1.msra.mxu0 0.0
    %1409 = vmatprep.subr.mxu0 0.0
    %1410 = vmatpush1.msra.mxu0 0.0
    %1411 = vmatprep.subr.mxu0 0.0
    %1412 = vmatpush1.msra.mxu0 0.0
    %1413 = vmatprep.subr.mxu0 0.0
    %1414 = vmatpush1.msra.mxu0 0.0
    %1415 = vmatprep.subr.mxu0 0.0
    %1416 = vmatpush1.msra.mxu0 0.0
    %1417 = vmatprep.subr.mxu0 0.0
    %1418 = vmatpush1.msra.mxu0 0.0
    %1419 = vmatprep.subr.mxu0 0.0
    %1420 = vmatpush1.msra.mxu0 0.0
    %1421 = vmatprep.subr.mxu0 0.0
    %1422 = vmatpush1.msra.mxu0 0.0
    %1423 = vmatprep.subr.mxu0 0.0
    %1424 = vmatpush1.msra.mxu0 0.0
    %1425 = vmatprep.subr.mxu0 0.0
    %1426 = vmatpush1.msra.mxu0 0.0
    %1427 = vmatprep.subr.mxu0 0.0
    %1428 = vmatpush1.msra.mxu0 0.0
    %1429 = vmatprep.subr.mxu0 0.0
    %1430 = vmatpush1.msra.mxu0 0.0
    %1431 = vmatprep.subr.mxu0 0.0
    %1432 = vmatpush1.msra.mxu0 0.0
    %1433 = vmatprep.subr.mxu0 0.0
    %1434 = vmatpush1.msra.mxu0 0.0
    %1435 = vmatprep.subr.mxu0 0.0
    %1436 = vmatpush1.msra.mxu0 0.0
    %1437 = vmatprep.subr.mxu0 0.0
    %1438 = vmatpush1.msra.mxu0 0.0
    %1439 = vmatprep.subr.mxu0 0.0
    %1440 = vmatpush1.msra.mxu0 0.0
    %1441 = vmatprep.subr.mxu0 0.0
    %1442 = vmatpush1.msra.mxu0 0.0
    %1443 = vmatprep.subr.mxu0 0.0
    %1444 = vmatpush1.msra.mxu0 0.0
    %1445 = vmatprep.subr.mxu0 0.0
    %1446 = vmatpush1.msra.mxu0 0.0
    %1447 = vmatprep.mubr.f32.mxu0 0.0
    %1448 = vmatmul.mubr.f32.gmra.mrb[0].mxu0 %v1381
    %v1449 = vpop.f32.mrb[0].mxu0
    %v1450 = vadd.f32 0.0, %v1449
    %v1451 = vpop.f32.mrb[0].mxu0
    %1452 = vdwg.mxu0
    %v1453 = vadd.f32 %v1378, %v1450
    %1454 = vrot.lane.b32.xlu0 %v855, 112
    %v1455 = vpop.permute.xlu0 %1454
    %v1456 = vsel %vm480, %v1455, 0
    %1458 = vmatprep.subr.mxu0 0.0
    %1459 = vmatpush1.msra.mxu0 %v853
    %1460 = vmatprep.subr.mxu0 0.0
    %1461 = vmatpush1.msra.mxu0 %v854
    %1462 = vmatprep.subr.mxu0 0.0
    %1463 = vmatpush1.msra.mxu0 0.0
    %1464 = vmatprep.subr.mxu0 0.0
    %1465 = vmatpush1.msra.mxu0 0.0
    %1466 = vmatprep.subr.mxu0 0.0
    %1467 = vmatpush1.msra.mxu0 0.0
    %1468 = vmatprep.subr.mxu0 0.0
    %1469 = vmatpush1.msra.mxu0 0.0
    %1470 = vmatprep.subr.mxu0 0.0
    %1471 = vmatpush1.msra.mxu0 0.0
    %1472 = vmatprep.subr.mxu0 0.0
    %1473 = vmatpush1.msra.mxu0 0.0
    %1474 = vmatprep.subr.mxu0 0.0
    %1475 = vmatpush1.msra.mxu0 0.0
    %1476 = vmatprep.subr.mxu0 0.0
    %1477 = vmatpush1.msra.mxu0 0.0
    %1478 = vmatprep.subr.mxu0 0.0
    %1479 = vmatpush1.msra.mxu0 0.0
    %1480 = vmatprep.subr.mxu0 0.0
    %1481 = vmatpush1.msra.mxu0 0.0
    %1482 = vmatprep.subr.mxu0 0.0
    %1483 = vmatpush1.msra.mxu0 0.0
    %1484 = vmatprep.subr.mxu0 0.0
    %1485 = vmatpush1.msra.mxu0 0.0
    %1486 = vmatprep.subr.mxu0 0.0
    %1487 = vmatpush1.msra.mxu0 0.0
    %1488 = vmatprep.subr.mxu0 0.0
    %1489 = vmatpush1.msra.mxu0 0.0
    %1490 = vmatprep.subr.mxu0 0.0
    %1491 = vmatpush1.msra.mxu0 0.0
    %1492 = vmatprep.subr.mxu0 0.0
    %1493 = vmatpush1.msra.mxu0 0.0
    %1494 = vmatprep.subr.mxu0 0.0
    %1495 = vmatpush1.msra.mxu0 0.0
    %1496 = vmatprep.subr.mxu0 0.0
    %1497 = vmatpush1.msra.mxu0 0.0
    %1498 = vmatprep.subr.mxu0 0.0
    %1499 = vmatpush1.msra.mxu0 0.0
    %1500 = vmatprep.subr.mxu0 0.0
    %1501 = vmatpush1.msra.mxu0 0.0
    %1502 = vmatprep.subr.mxu0 0.0
    %1503 = vmatpush1.msra.mxu0 0.0
    %1504 = vmatprep.subr.mxu0 0.0
    %1505 = vmatpush1.msra.mxu0 0.0
    %1506 = vmatprep.subr.mxu0 0.0
    %1507 = vmatpush1.msra.mxu0 0.0
    %1508 = vmatprep.subr.mxu0 0.0
    %1509 = vmatpush1.msra.mxu0 0.0
    %1510 = vmatprep.subr.mxu0 0.0
    %1511 = vmatpush1.msra.mxu0 0.0
    %1512 = vmatprep.subr.mxu0 0.0
    %1513 = vmatpush1.msra.mxu0 0.0
    %1514 = vmatprep.subr.mxu0 0.0
    %1515 = vmatpush1.msra.mxu0 0.0
    %1516 = vmatprep.subr.mxu0 0.0
    %1517 = vmatpush1.msra.mxu0 0.0
    %1518 = vmatprep.subr.mxu0 0.0
    %1519 = vmatpush1.msra.mxu0 0.0
    %1520 = vmatprep.subr.mxu0 0.0
    %1521 = vmatpush1.msra.mxu0 0.0
    %1522 = vmatprep.mubr.f32.mxu0 0.0
    %1523 = vmatmul.mubr.f32.gmra.mrb[0].mxu0 %v1456
    %v1524 = vpop.f32.mrb[0].mxu0
    %v1525 = vadd.f32 0.0, %v1524
    %v1526 = vpop.f32.mrb[0].mxu0
    %1527 = vdwg.mxu0
    %v1528 = vadd.f32 %v1453, %v1525
    %1529 = vrot.lane.b32.xlu0 %v931, 112
    %v1530 = vpop.permute.xlu0 %1529
    %v1531 = vsel %vm480, %v1530, 0
    %1533 = vmatprep.subr.mxu0 0.0
    %1534 = vmatpush1.msra.mxu0 %v929
    %1535 = vmatprep.subr.mxu0 0.0
    %1536 = vmatpush1.msra.mxu0 %v930
    %1537 = vmatprep.subr.mxu0 0.0
    %1538 = vmatpush1.msra.mxu0 0.0
    %1539 = vmatprep.subr.mxu0 0.0
    %1540 = vmatpush1.msra.mxu0 0.0
    %1541 = vmatprep.subr.mxu0 0.0
    %1542 = vmatpush1.msra.mxu0 0.0
    %1543 = vmatprep.subr.mxu0 0.0
    %1544 = vmatpush1.msra.mxu0 0.0
    %1545 = vmatprep.subr.mxu0 0.0
    %1546 = vmatpush1.msra.mxu0 0.0
    %1547 = vmatprep.subr.mxu0 0.0
    %1548 = vmatpush1.msra.mxu0 0.0
    %1549 = vmatprep.subr.mxu0 0.0
    %1550 = vmatpush1.msra.mxu0 0.0
    %1551 = vmatprep.subr.mxu0 0.0
    %1552 = vmatpush1.msra.mxu0 0.0
    %1553 = vmatprep.subr.mxu0 0.0
    %1554 = vmatpush1.msra.mxu0 0.0
    %1555 = vmatprep.subr.mxu0 0.0
    %1556 = vmatpush1.msra.mxu0 0.0
    %1557 = vmatprep.subr.mxu0 0.0
    %1558 = vmatpush1.msra.mxu0 0.0
    %1559 = vmatprep.subr.mxu0 0.0
    %1560 = vmatpush1.msra.mxu0 0.0
    %1561 = vmatprep.subr.mxu0 0.0
    %1562 = vmatpush1.msra.mxu0 0.0
    %1563 = vmatprep.subr.mxu0 0.0
    %1564 = vmatpush1.msra.mxu0 0.0
    %1565 = vmatprep.subr.mxu0 0.0
    %1566 = vmatpush1.msra.mxu0 0.0
    %1567 = vmatprep.subr.mxu0 0.0
    %1568 = vmatpush1.msra.mxu0 0.0
    %1569 = vmatprep.subr.mxu0 0.0
    %1570 = vmatpush1.msra.mxu0 0.0
    %1571 = vmatprep.subr.mxu0 0.0
    %1572 = vmatpush1.msra.mxu0 0.0
    %1573 = vmatprep.subr.mxu0 0.0
    %1574 = vmatpush1.msra.mxu0 0.0
    %1575 = vmatprep.subr.mxu0 0.0
    %1576 = vmatpush1.msra.mxu0 0.0
    %1577 = vmatprep.subr.mxu0 0.0
    %1578 = vmatpush1.msra.mxu0 0.0
    %1579 = vmatprep.subr.mxu0 0.0
    %1580 = vmatpush1.msra.mxu0 0.0
    %1581 = vmatprep.subr.mxu0 0.0
    %1582 = vmatpush1.msra.mxu0 0.0
    %1583 = vmatprep.subr.mxu0 0.0
    %1584 = vmatpush1.msra.mxu0 0.0
    %1585 = vmatprep.subr.mxu0 0.0
    %1586 = vmatpush1.msra.mxu0 0.0
    %1587 = vmatprep.subr.mxu0 0.0
    %1588 = vmatpush1.msra.mxu0 0.0
    %1589 = vmatprep.subr.mxu0 0.0
    %1590 = vmatpush1.msra.mxu0 0.0
    %1591 = vmatprep.subr.mxu0 0.0
    %1592 = vmatpush1.msra.mxu0 0.0
    %1593 = vmatprep.subr.mxu0 0.0
    %1594 = vmatpush1.msra.mxu0 0.0
    %1595 = vmatprep.subr.mxu0 0.0
    %1596 = vmatpush1.msra.mxu0 0.0
    %1597 = vmatprep.mubr.f32.mxu0 0.0
    %1598 = vmatmul.mubr.f32.gmra.mrb[0].mxu0 %v1531
    %v1599 = vpop.f32.mrb[0].mxu0
    %v1600 = vadd.f32 0.0, %v1599
    %v1601 = vpop.f32.mrb[0].mxu0
    %1602 = vdwg.mxu0
    %v1603 = vadd.f32 %v1528, %v1600
    %1604 = vrot.lane.b32.xlu0 %v1007, 112
    %v1605 = vpop.permute.xlu0 %1604
    %v1606 = vsel %vm480, %v1605, 0
    %1608 = vmatprep.subr.mxu0 0.0
    %1609 = vmatpush1.msra.mxu0 %v1005
    %1610 = vmatprep.subr.mxu0 0.0
    %1611 = vmatpush1.msra.mxu0 %v1006
    %1612 = vmatprep.subr.mxu0 0.0
    %1613 = vmatpush1.msra.mxu0 0.0
    %1614 = vmatprep.subr.mxu0 0.0
    %1615 = vmatpush1.msra.mxu0 0.0
    %1616 = vmatprep.subr.mxu0 0.0
    %1617 = vmatpush1.msra.mxu0 0.0
    %1618 = vmatprep.subr.mxu0 0.0
    %1619 = vmatpush1.msra.mxu0 0.0
    %1620 = vmatprep.subr.mxu0 0.0
    %1621 = vmatpush1.msra.mxu0 0.0
    %1622 = vmatprep.subr.mxu0 0.0
    %1623 = vmatpush1.msra.mxu0 0.0
    %1624 = vmatprep.subr.mxu0 0.0
    %1625 = vmatpush1.msra.mxu0 0.0
    %1626 = vmatprep.subr.mxu0 0.0
    %1627 = vmatpush1.msra.mxu0 0.0
    %1628 = vmatprep.subr.mxu0 0.0
    %1629 = vmatpush1.msra.mxu0 0.0
    %1630 = vmatprep.subr.mxu0 0.0
    %1631 = vmatpush1.msra.mxu0 0.0
    %1632 = vmatprep.subr.mxu0 0.0
    %1633 = vmatpush1.msra.mxu0 0.0
    %1634 = vmatprep.subr.mxu0 0.0
    %1635 = vmatpush1.msra.mxu0 0.0
    %1636 = vmatprep.subr.mxu0 0.0
    %1637 = vmatpush1.msra.mxu0 0.0
    %1638 = vmatprep.subr.mxu0 0.0
    %1639 = vmatpush1.msra.mxu0 0.0
    %1640 = vmatprep.subr.mxu0 0.0
    %1641 = vmatpush1.msra.mxu0 0.0
    %1642 = vmatprep.subr.mxu0 0.0
    %1643 = vmatpush1.msra.mxu0 0.0
    %1644 = vmatprep.subr.mxu0 0.0
    %1645 = vmatpush1.msra.mxu0 0.0
    %1646 = vmatprep.subr.mxu0 0.0
    %1647 = vmatpush1.msra.mxu0 0.0
    %1648 = vmatprep.subr.mxu0 0.0
    %1649 = vmatpush1.msra.mxu0 0.0
    %1650 = vmatprep.subr.mxu0 0.0
    %1651 = vmatpush1.msra.mxu0 0.0
    %1652 = vmatprep.subr.mxu0 0.0
    %1653 = vmatpush1.msra.mxu0 0.0
    %1654 = vmatprep.subr.mxu0 0.0
    %1655 = vmatpush1.msra.mxu0 0.0
    %1656 = vmatprep.subr.mxu0 0.0
    %1657 = vmatpush1.msra.mxu0 0.0
    %1658 = vmatprep.subr.mxu0 0.0
    %1659 = vmatpush1.msra.mxu0 0.0
    %1660 = vmatprep.subr.mxu0 0.0
    %1661 = vmatpush1.msra.mxu0 0.0
    %1662 = vmatprep.subr.mxu0 0.0
    %1663 = vmatpush1.msra.mxu0 0.0
    %1664 = vmatprep.subr.mxu0 0.0
    %1665 = vmatpush1.msra.mxu0 0.0
    %1666 = vmatprep.subr.mxu0 0.0
    %1667 = vmatpush1.msra.mxu0 0.0
    %1668 = vmatprep.subr.mxu0 0.0
    %1669 = vmatpush1.msra.mxu0 0.0
    %1670 = vmatprep.subr.mxu0 0.0
    %1671 = vmatpush1.msra.mxu0 0.0
    %1672 = vmatprep.mubr.f32.mxu0 0.0
    %1673 = vmatmul.mubr.f32.gmra.mrb[0].mxu0 %v1606
    %v1674 = vpop.f32.mrb[0].mxu0
    %v1675 = vadd.f32 0.0, %v1674
    %v1676 = vpop.f32.mrb[0].mxu0
    %1677 = vdwg.mxu0
    %v1678 = vadd.f32 %v1603, %v1675
    %v1680 = vrot.slane %v1678, 7
    %vm1682 = vcmask 1040384
    %v1683 = vsel %vm1682, %v1080, %v1680
    %v1684 = vld [vmem:[%s1 + $0xc0] sm:$0x1]
    %v1685 = vlaneseq
    %v1686 = vshrl.u32 %v1685, 7
    %v1687 = vsub.s32 0, %v1686
    %v1688 = vrot.slane %v1684, %v1687
    %v1689 = vadd.f32 %v1683, %v1688
    %v1690 = vmax.f32 %v1689, 0.0
    %v1691 = vld [vmem:[%s1 + $0xc8] sm:$0xff]
    %v1692 = vld [vmem:[%s1 + $0xd0] sm:$0xff]
    %v1693 = vld [vmem:[%s1 + $0xd8] sm:$0xff]
    %v1694 = vld [vmem:[%s1 + $0xe0] sm:$0xff]
    %v1695 = vld [vmem:[%s1 + $0xe8] sm:$0x1]
    %v1696 = vlaneseq
    %v1697 = vshrl.u32 %v1696, 7
    %v1698 = vsub.s32 0, %v1697
    %v1699 = vrot.slane %v1695, %v1698
    %vm1700 = vcmask 261120
    %v1702 = vsel %vm1700, %v1690, 0
    %1704 = vmatprep.subr.mxu0 0.0
    %1705 = vmatpush1.msra.mxu0 %v1691
    %1706 = vmatprep.subr.mxu0 0.0
    %1707 = vmatpush1.msra.mxu0 %v1692
    %1708 = vmatprep.subr.mxu0 0.0
    %1709 = vmatpush1.msra.mxu0 %v1693
    %1710 = vmatprep.subr.mxu0 0.0
    %1711 = vmatpush1.msra.mxu0 %v1694
    %1712 = vmatprep.subr.mxu0 0.0
    %1713 = vmatpush1.msra.mxu0 0.0
    %1714 = vmatprep.subr.mxu0 0.0
    %1715 = vmatpush1.msra.mxu0 0.0
    %1716 = vmatprep.subr.mxu0 0.0
    %1717 = vmatpush1.msra.mxu0 0.0
    %1718 = vmatprep.subr.mxu0 0.0
    %1719 = vmatpush1.msra.mxu0 0.0
    %1720 = vmatprep.subr.mxu0 0.0
    %1721 = vmatpush1.msra.mxu0 0.0
    %1722 = vmatprep.subr.mxu0 0.0
    %1723 = vmatpush1.msra.mxu0 0.0
    %1724 = vmatprep.subr.mxu0 0.0
    %1725 = vmatpush1.msra.mxu0 0.0
    %1726 = vmatprep.subr.mxu0 0.0
    %1727 = vmatpush1.msra.mxu0 0.0
    %1728 = vmatprep.subr.mxu0 0.0
    %1729 = vmatpush1.msra.mxu0 0.0
    %1730 = vmatprep.subr.mxu0 0.0
    %1731 = vmatpush1.msra.mxu0 0.0
    %1732 = vmatprep.subr.mxu0 0.0
    %1733 = vmatpush1.msra.mxu0 0.0
    %1734 = vmatprep.subr.mxu0 0.0
    %1735 = vmatpush1.msra.mxu0 0.0
    %1736 = vmatprep.subr.mxu0 0.0
    %1737 = vmatpush1.msra.mxu0 0.0
    %1738 = vmatprep.subr.mxu0 0.0
    %1739 = vmatpush1.msra.mxu0 0.0
    %1740 = vmatprep.subr.mxu0 0.0
    %1741 = vmatpush1.msra.mxu0 0.0
    %1742 = vmatprep.subr.mxu0 0.0
    %1743 = vmatpush1.msra.mxu0 0.0
    %1744 = vmatprep.subr.mxu0 0.0
    %1745 = vmatpush1.msra.mxu0 0.0
    %1746 = vmatprep.subr.mxu0 0.0
    %1747 = vmatpush1.msra.mxu0 0.0
    %1748 = vmatprep.subr.mxu0 0.0
    %1749 = vmatpush1.msra.mxu0 0.0
    %1750 = vmatprep.subr.mxu0 0.0
    %1751 = vmatpush1.msra.mxu0 0.0
    %1752 = vmatprep.subr.mxu0 0.0
    %1753 = vmatpush1.msra.mxu0 0.0
    %1754 = vmatprep.subr.mxu0 0.0
    %1755 = vmatpush1.msra.mxu0 0.0
    %1756 = vmatprep.subr.mxu0 0.0
    %1757 = vmatpush1.msra.mxu0 0.0
    %1758 = vmatprep.subr.mxu0 0.0
    %1759 = vmatpush1.msra.mxu0 0.0
    %1760 = vmatprep.subr.mxu0 0.0
    %1761 = vmatpush1.msra.mxu0 0.0
    %1762 = vmatprep.subr.mxu0 0.0
    %1763 = vmatpush1.msra.mxu0 0.0
    %1764 = vmatprep.subr.mxu0 0.0
    %1765 = vmatpush1.msra.mxu0 0.0
    %1766 = vmatprep.subr.mxu0 0.0
    %1767 = vmatpush1.msra.mxu0 0.0
    %1768 = vmatprep.mubr.f32.mxu0 0.0
    %1769 = vmatmul.mubr.f32.gmra.mrb[0].mxu0 %v1702
    %v1770 = vpop.f32.mrb[0].mxu0
    %v1771 = vadd.f32 %v1699, %v1770
    %v1772 = vpop.f32.mrb[0].mxu0
    %1773 = vdwg.mxu0
    %vm1774 = vcmask 74752
    %1775 = vst.msk [vmem:[#allocation2] sm:$0x3] %vm1774, %v1771
    // Predicated region
    $region10: #{convnn_forward.1} parent=1 // pred_check
      _
    $region11: #{convnn_forward.1} parent=1 // pred_check_branch
      %1777 = sbr.rel (0) target = $region13
    $region12: #{convnn_forward.1} parent=1 // pred_region
      %s1779 = ssub.s32 32, 32
      %1780 = vsyncadd [#allocation3], %s1779
      %s1782 = sshll.u32 [#allocation2], 4
      %s1783 = int_to_ptr.vmem [resolvable:$true] %s1782
      %1785 = dma.vmem_to_hbm [thread:$0]  %s1783, 32, %s2, [#allocation3]
    $region13: #{convnn_forward.1} parent=1 // pred_fallthru
      _
    // Predicated region
    $region14: #{convnn_forward.1} parent=1 // pred_check
      _
    $region15: #{convnn_forward.1} parent=1 // pred_check_branch
      %1787 = sbr.rel (0) target = $region17
    $region16: #{convnn_forward.1} parent=1 // pred_region
      %1788 = dma.done [#allocation3], 32
    $region17: #{convnn_forward.1} parent=1 // pred_fallthru
      _
    %1789 = vsyncpa [#allocation3], 1

</llo_original>
